<compile_context>
chip_gen: v7x
topology: tpu7x:2x2x1
jax: 0.10.0
libtpu: 0.0.40
codegen_flags: <defaults>
</compile_context>

<pallas_src>
import functools

import jax
import jax.numpy as jnp
from jax.experimental import pallas as pl
from jax.experimental.pallas import tpu as pltpu


# ------------------------------ Fused network kernel ------------------------------

def _lstm_net_fused_kernel(*refs, num_layers, seq_len, hidden):
    """refs = [x2d, (w_ih_t, w_hh_t, b) * L, fc_w_t, fc_b] + [y] + [gx_scr, hseq_scr]."""
    T, H = seq_len, hidden

    x_ref = refs[0]                                               # (T*Bp, I) time-major
    layer_refs = [(refs[1 + 3 * l], refs[2 + 3 * l], refs[3 + 3 * l])
                  for l in range(num_layers)]
    fc_w_ref = refs[1 + 3 * num_layers]                           # (H, O)
    fc_b_ref = refs[2 + 3 * num_layers]                           # (1, O)
    y_ref = refs[3 + 3 * num_layers]                              # (Bp, O)
    gx_scr = refs[4 + 3 * num_layers]                             # (T, Bp, 4H) f32
    hseq_scr = refs[5 + 3 * num_layers]                           # (T, Bp, H)  f32

    Bp = gx_scr.shape[1]
    h_last = jnp.zeros((Bp, H), jnp.float32)

    for layer_idx, (wih_ref, whh_ref, b_ref) in enumerate(layer_refs):
        is_last_layer = layer_idx == num_layers - 1

        # ---- Hoisted input projection: one big MXU matmul over all T steps, bias folded ----
        if layer_idx == 0:
            seq2d = x_ref[...]                                    # already (T*Bp, I) time-major
        else:
            seq2d = hseq_scr[...].reshape(T * Bp, H)              # time-major rows (t*Bp + b)
        gx = jnp.dot(seq2d, wih_ref[...],
                     preferred_element_type=jnp.float32) + b_ref[...]
        gx_scr[...] = gx.reshape(T, Bp, 4 * H)

        # ---- Serial recurrence: only h_{t-1} @ W_hh^T + gate math on the critical path ----
        whh = whh_ref[...]                                        # (H, 4H), stays resident

        def step(t, carry, is_last_layer=is_last_layer):
            h_prev, c_prev = carry
            g = gx_scr[t] + jnp.dot(h_prev, whh,
                                    preferred_element_type=jnp.float32)   # (Bp, 4H)
            # PyTorch gate order: input, forget, cell (g), output.
            i = jax.nn.sigmoid(g[:, 0 * H:1 * H])
            f = jax.nn.sigmoid(g[:, 1 * H:2 * H])
            gg = jnp.tanh(g[:, 2 * H:3 * H])
            o = jax.nn.sigmoid(g[:, 3 * H:4 * H])
            c = f * c_prev + i * gg
            h = o * jnp.tanh(c)
            if not is_last_layer:
                hseq_scr[t] = h                                   # input to the next layer
            return (h, c)

        zero = jnp.zeros((Bp, H), jnp.float32)
        h_last, _ = jax.lax.fori_loop(0, T, step, (zero, zero), unroll=True)

    # ---- Fused FC head: y = relu(h[-1]) @ W_fc^T + b_fc ----
    y_ref[...] = (jnp.dot(jnp.maximum(h_last, 0.0), fc_w_ref[...],
                          preferred_element_type=jnp.float32)
                  + fc_b_ref[...])


def _build_fused_call(Bp, T, H, O, num_layers):
    kernel = functools.partial(_lstm_net_fused_kernel,
                               num_layers=num_layers, seq_len=T, hidden=H)
    n_inputs = 1 + 3 * num_layers + 2
    vmem = pltpu.MemorySpace.VMEM
    return pl.pallas_call(
        kernel,
        out_shape=jax.ShapeDtypeStruct((Bp, O), jnp.float32),
        in_specs=[pl.BlockSpec(memory_space=vmem)] * n_inputs,
        out_specs=pl.BlockSpec(memory_space=vmem),
        scratch_shapes=[
            pltpu.VMEM((T, Bp, 4 * H), jnp.float32),   # gates_x of the current layer
            pltpu.VMEM((T, Bp, H), jnp.float32),       # h sequence feeding the next layer
        ],
    )


# ------------------------------ Parameter setup ------------------------------

def init_lstm_net_params(key, input_size, hidden_size, output_size, num_layers):
    """Deterministic init mirroring PyTorch shapes (uniform(-1/sqrt(H), 1/sqrt(H)))."""
    k = 1.0 / jnp.sqrt(jnp.float32(hidden_size))
    params = {"lstm": [], "fc": {}}
    for layer in range(num_layers):
        in_sz = input_size if layer == 0 else hidden_size
        key, k1, k2, k3, k4 = jax.random.split(key, 5)
        w_ih = jax.random.uniform(k1, (4 * hidden_size, in_sz), jnp.float32, -k, k)
        w_hh = jax.random.uniform(k2, (4 * hidden_size, hidden_size), jnp.float32, -k, k)
        b_ih = jax.random.uniform(k3, (4 * hidden_size,), jnp.float32, -k, k)
        b_hh = jax.random.uniform(k4, (4 * hidden_size,), jnp.float32, -k, k)
        params["lstm"].append({
            "w_ih_t": w_ih.T,                                # (in, 4H)
            "w_hh_t": w_hh.T,                                # (H, 4H)
            "b": (b_ih + b_hh).reshape(1, 4 * hidden_size),  # (1, 4H)
        })
    key, k5, k6 = jax.random.split(key, 3)
    fc_w = jax.random.uniform(k5, (output_size, hidden_size), jnp.float32, -k, k)
    fc_b = jax.random.uniform(k6, (output_size,), jnp.float32, -k, k)
    params["fc"] = {"w_t": fc_w.T, "b": fc_b.reshape(1, output_size)}
    return params


# ------------------------------- Forward pass --------------------------------

@jax.jit
def lstm_net_forward(x_bti, params):
    """x_bti: (B, T, I) batch_first, like the PyTorch module. Returns (B, O) float32."""
    B, T, I = x_bti.shape
    H = params["lstm"][0]["w_hh_t"].shape[0]
    O = params["fc"]["w_t"].shape[1]
    L = len(params["lstm"])

    Bp = ((B + 7) // 8) * 8                     # pad batch to the 8-row f32 sublane tile
    x_p = jnp.pad(x_bti.astype(jnp.float32), ((0, Bp - B), (0, 0), (0, 0)))
    # Time-major, flattened: rows ordered as (t*Bp + b) so the layer-0 projection result
    # is already in the layout the recurrence consumes.
    x_tb = jnp.transpose(x_p, (1, 0, 2)).reshape(T * Bp, I)

    flat = [x_tb]
    for layer in params["lstm"]:
        flat += [layer["w_ih_t"], layer["w_hh_t"], layer["b"]]
    flat += [params["fc"]["w_t"], params["fc"]["b"]]

    y_p = _build_fused_call(Bp, T, H, O, L)(*flat)
    return y_p[:B]


# Pure-JAX reference (for self-check of the Pallas kernel).
def lstm_net_reference(x_bti, params):
    x = jnp.transpose(x_bti, (1, 0, 2))          # (T, B, I)
    for layer in params["lstm"]:
        B = x.shape[1]
        H = layer["w_hh_t"].shape[0]
        h = jnp.zeros((B, H), jnp.float32)
        c = jnp.zeros((B, H), jnp.float32)

        def step(carry, x_t, layer=layer, H=H):
            h, c = carry
            gates = x_t @ layer["w_ih_t"] + h @ layer["w_hh_t"] + layer["b"]
            i = jax.nn.sigmoid(gates[:, 0 * H:1 * H])
            f = jax.nn.sigmoid(gates[:, 1 * H:2 * H])
            g = jnp.tanh(gates[:, 2 * H:3 * H])
            o = jax.nn.sigmoid(gates[:, 3 * H:4 * H])
            c_new = f * c + i * g
            h_new = o * jnp.tanh(c_new)
            return (h_new, c_new), h_new

        (_, _), h_all = jax.lax.scan(step, (h, c), x)
        x = h_all
    h_last = x[-1]
    return jnp.maximum(h_last, 0.0) @ params["fc"]["w_t"] + params["fc"]["b"]


if __name__ == "__main__":
    # Small shapes consistent with the module's forward.
    B, T = 2, 8
    INPUT_SIZE, HIDDEN_SIZE, OUTPUT_SIZE, NUM_LAYERS = 16, 32, 4, 2

    key = jax.random.PRNGKey(0)
    key, xk = jax.random.split(key)
    x = jax.random.normal(xk, (B, T, INPUT_SIZE), jnp.float32)

    params = init_lstm_net_params(key, INPUT_SIZE, HIDDEN_SIZE, OUTPUT_SIZE, NUM_LAYERS)

    y = lstm_net_forward(x, params)
    y = jax.block_until_ready(y)
    assert y.shape == (B, OUTPUT_SIZE)

    y_ref = lstm_net_reference(x, params)
    assert jnp.allclose(y, y_ref, atol=1e-5, rtol=1e-5), "Pallas vs JAX reference mismatch"

    print("KERNEL_OK")
</pallas_src>

<mosaic_0001>
module attributes {stable_mosaic.version = 11 : i64} {
  func.func @_lstm_net_fused_kernel(%arg0: memref<64x16xf32, #tpu.memory_space<vmem>>, %arg1: memref<16x128xf32, #tpu.memory_space<vmem>>, %arg2: memref<32x128xf32, #tpu.memory_space<vmem>>, %arg3: memref<1x128xf32, #tpu.memory_space<vmem>>, %arg4: memref<32x128xf32, #tpu.memory_space<vmem>>, %arg5: memref<32x128xf32, #tpu.memory_space<vmem>>, %arg6: memref<1x128xf32, #tpu.memory_space<vmem>>, %arg7: memref<32x4xf32, #tpu.memory_space<vmem>>, %arg8: memref<1x4xf32, #tpu.memory_space<vmem>>, %arg9: memref<8x4xf32, #tpu.memory_space<vmem>>, %arg10: memref<8x8x128xf32, #tpu.memory_space<vmem>>, %arg11: memref<8x8x32xf32, #tpu.memory_space<vmem>>) attributes {dimension_semantics = [], scalar_prefetch = 0 : i64, scratch_operands = 2 : i64, tpu.core_type = #tpu.core_type<tc>} {
    %c0 = arith.constant 0 : index
    %c0_0 = arith.constant 0 : index
    %0 = vector.load %arg0[%c0, %c0_0] : memref<64x16xf32, #tpu.memory_space<vmem>>, vector<64x16xf32>
    %c0_1 = arith.constant 0 : index
    %c0_2 = arith.constant 0 : index
    %1 = vector.load %arg1[%c0_1, %c0_2] : memref<16x128xf32, #tpu.memory_space<vmem>>, vector<16x128xf32>
    %cst = arith.constant dense<0.000000e+00> : vector<64x128xf32>
    %2 = tpu.matmul %0, %1, %cst {dimension_numbers = #tpu.dot_dimension_numbers<[1], [0], [0], [1], [0, 0, 1, 1], [], []>} : vector<64x16xf32>, vector<16x128xf32>, vector<64x128xf32> -> vector<64x128xf32>
    %c0_3 = arith.constant 0 : index
    %c0_4 = arith.constant 0 : index
    %3 = vector.load %arg3[%c0_3, %c0_4] : memref<1x128xf32, #tpu.memory_space<vmem>>, vector<1x128xf32>
    %4 = vector.broadcast %3 : vector<1x128xf32> to vector<64x128xf32>
    %5 = arith.addf %2, %4 : vector<64x128xf32>
    %6 = vector.shape_cast %5 : vector<64x128xf32> to vector<8x8x128xf32>
    %c0_5 = arith.constant 0 : index
    %c0_6 = arith.constant 0 : index
    %c0_7 = arith.constant 0 : index
    %7 = vector.load %arg10[%c0_5, %c0_6, %c0_7] : memref<8x8x128xf32, #tpu.memory_space<vmem>>, vector<8x8x128xf32>
    tpu.vector_store %arg10[%c0_5, %c0_6, %c0_7], %6 {strides = array<i32>} : memref<8x8x128xf32, #tpu.memory_space<vmem>>, vector<8x8x128xf32>,
    %c0_8 = arith.constant 0 : index
    %c0_9 = arith.constant 0 : index
    %8 = vector.load %arg2[%c0_8, %c0_9] : memref<32x128xf32, #tpu.memory_space<vmem>>, vector<32x128xf32>
    %cst_10 = arith.constant 0.000000e+00 : f32
    %9 = vector.broadcast %cst_10 : f32 to vector<8x32xf32>
    %c0_i32 = arith.constant 0 : i32
    %10 = arith.index_cast %c0_i32 : i32 to index
    %c0_11 = arith.constant 0 : index
    %c0_12 = arith.constant 0 : index
    %11 = vector.load %arg10[%10, %c0_11, %c0_12] : memref<8x8x128xf32, #tpu.memory_space<vmem>>, vector<1x8x128xf32>
    %12 = vector.shape_cast %11 : vector<1x8x128xf32> to vector<8x128xf32>
    %cst_13 = arith.constant dense<0.000000e+00> : vector<8x128xf32>
    %13 = tpu.matmul %9, %8, %cst_13 {dimension_numbers = #tpu.dot_dimension_numbers<[1], [0], [0], [1], [0, 0, 1, 1], [], []>} : vector<8x32xf32>, vector<32x128xf32>, vector<8x128xf32> -> vector<8x128xf32>
    %14 = arith.addf %12, %13 : vector<8x128xf32>
    %15 = vector.extract_strided_slice %14 {offsets = [0, 0], sizes = [8, 32], strides = [1, 1]} : vector<8x128xf32> to vector<8x32xf32>
    %16 = arith.negf %15 : vector<8x32xf32>
    %17 = math.exp %16 : vector<8x32xf32>
    %cst_14 = arith.constant 1.000000e+00 : f32
    %18 = vector.broadcast %cst_14 : f32 to vector<8x32xf32>
    %19 = arith.addf %18, %17 : vector<8x32xf32>
    %20 = arith.divf %18, %19 : vector<8x32xf32>
    %21 = vector.extract_strided_slice %14 {offsets = [0, 32], sizes = [8, 32], strides = [1, 1]} : vector<8x128xf32> to vector<8x32xf32>
    %22 = arith.negf %21 : vector<8x32xf32>
    %23 = math.exp %22 : vector<8x32xf32>
    %cst_15 = arith.constant 1.000000e+00 : f32
    %24 = vector.broadcast %cst_15 : f32 to vector<8x32xf32>
    %25 = arith.addf %24, %23 : vector<8x32xf32>
    %26 = arith.divf %24, %25 : vector<8x32xf32>
    %27 = vector.extract_strided_slice %14 {offsets = [0, 64], sizes = [8, 32], strides = [1, 1]} : vector<8x128xf32> to vector<8x32xf32>
    %28 = math.tanh %27 : vector<8x32xf32>
    %29 = vector.extract_strided_slice %14 {offsets = [0, 96], sizes = [8, 32], strides = [1, 1]} : vector<8x128xf32> to vector<8x32xf32>
    %30 = arith.negf %29 : vector<8x32xf32>
    %31 = math.exp %30 : vector<8x32xf32>
    %cst_16 = arith.constant 1.000000e+00 : f32
    %32 = vector.broadcast %cst_16 : f32 to vector<8x32xf32>
    %33 = arith.addf %32, %31 : vector<8x32xf32>
    %34 = arith.divf %32, %33 : vector<8x32xf32>
    %35 = arith.mulf %26, %9 : vector<8x32xf32>
    %36 = arith.mulf %20, %28 : vector<8x32xf32>
    %37 = arith.addf %35, %36 : vector<8x32xf32>
    %38 = math.tanh %37 : vector<8x32xf32>
    %39 = arith.mulf %34, %38 : vector<8x32xf32>
    %40 = arith.index_cast %c0_i32 : i32 to index
    %c0_17 = arith.constant 0 : index
    %c0_18 = arith.constant 0 : index
    %41 = vector.load %arg11[%40, %c0_17, %c0_18] : memref<8x8x32xf32, #tpu.memory_space<vmem>>, vector<1x8x32xf32>
    %42 = vector.shape_cast %41 : vector<1x8x32xf32> to vector<8x32xf32>
    %43 = vector.shape_cast %39 : vector<8x32xf32> to vector<1x8x32xf32>
    tpu.vector_store %arg11[%40, %c0_17, %c0_18], %43 {strides = array<i32>} : memref<8x8x32xf32, #tpu.memory_space<vmem>>, vector<1x8x32xf32>,
    %c1_i32 = arith.constant 1 : i32
    %44 = arith.index_cast %c1_i32 : i32 to index
    %c0_19 = arith.constant 0 : index
    %c0_20 = arith.constant 0 : index
    %45 = vector.load %arg10[%44, %c0_19, %c0_20] : memref<8x8x128xf32, #tpu.memory_space<vmem>>, vector<1x8x128xf32>
    %46 = vector.shape_cast %45 : vector<1x8x128xf32> to vector<8x128xf32>
    %cst_21 = arith.constant dense<0.000000e+00> : vector<8x128xf32>
    %47 = tpu.matmul %39, %8, %cst_21 {dimension_numbers = #tpu.dot_dimension_numbers<[1], [0], [0], [1], [0, 0, 1, 1], [], []>} : vector<8x32xf32>, vector<32x128xf32>, vector<8x128xf32> -> vector<8x128xf32>
    %48 = arith.addf %46, %47 : vector<8x128xf32>
    %49 = vector.extract_strided_slice %48 {offsets = [0, 0], sizes = [8, 32], strides = [1, 1]} : vector<8x128xf32> to vector<8x32xf32>
    %50 = arith.negf %49 : vector<8x32xf32>
    %51 = math.exp %50 : vector<8x32xf32>
    %cst_22 = arith.constant 1.000000e+00 : f32
    %52 = vector.broadcast %cst_22 : f32 to vector<8x32xf32>
    %53 = arith.addf %52, %51 : vector<8x32xf32>
    %54 = arith.divf %52, %53 : vector<8x32xf32>
    %55 = vector.extract_strided_slice %48 {offsets = [0, 32], sizes = [8, 32], strides = [1, 1]} : vector<8x128xf32> to vector<8x32xf32>
    %56 = arith.negf %55 : vector<8x32xf32>
    %57 = math.exp %56 : vector<8x32xf32>
    %cst_23 = arith.constant 1.000000e+00 : f32
    %58 = vector.broadcast %cst_23 : f32 to vector<8x32xf32>
    %59 = arith.addf %58, %57 : vector<8x32xf32>
    %60 = arith.divf %58, %59 : vector<8x32xf32>
    %61 = vector.extract_strided_slice %48 {offsets = [0, 64], sizes = [8, 32], strides = [1, 1]} : vector<8x128xf32> to vector<8x32xf32>
    %62 = math.tanh %61 : vector<8x32xf32>
    %63 = vector.extract_strided_slice %48 {offsets = [0, 96], sizes = [8, 32], strides = [1, 1]} : vector<8x128xf32> to vector<8x32xf32>
    %64 = arith.negf %63 : vector<8x32xf32>
    %65 = math.exp %64 : vector<8x32xf32>
    %cst_24 = arith.constant 1.000000e+00 : f32
    %66 = vector.broadcast %cst_24 : f32 to vector<8x32xf32>
    %67 = arith.addf %66, %65 : vector<8x32xf32>
    %68 = arith.divf %66, %67 : vector<8x32xf32>
    %69 = arith.mulf %60, %37 : vector<8x32xf32>
    %70 = arith.mulf %54, %62 : vector<8x32xf32>
    %71 = arith.addf %69, %70 : vector<8x32xf32>
    %72 = math.tanh %71 : vector<8x32xf32>
    %73 = arith.mulf %68, %72 : vector<8x32xf32>
    %74 = arith.index_cast %c1_i32 : i32 to index
    %c0_25 = arith.constant 0 : index
    %c0_26 = arith.constant 0 : index
    %75 = vector.load %arg11[%74, %c0_25, %c0_26] : memref<8x8x32xf32, #tpu.memory_space<vmem>>, vector<1x8x32xf32>
    %76 = vector.shape_cast %75 : vector<1x8x32xf32> to vector<8x32xf32>
    %77 = vector.shape_cast %73 : vector<8x32xf32> to vector<1x8x32xf32>
    tpu.vector_store %arg11[%74, %c0_25, %c0_26], %77 {strides = array<i32>} : memref<8x8x32xf32, #tpu.memory_space<vmem>>, vector<1x8x32xf32>,
    %c2_i32 = arith.constant 2 : i32
    %78 = arith.index_cast %c2_i32 : i32 to index
    %c0_27 = arith.constant 0 : index
    %c0_28 = arith.constant 0 : index
    %79 = vector.load %arg10[%78, %c0_27, %c0_28] : memref<8x8x128xf32, #tpu.memory_space<vmem>>, vector<1x8x128xf32>
    %80 = vector.shape_cast %79 : vector<1x8x128xf32> to vector<8x128xf32>
    %cst_29 = arith.constant dense<0.000000e+00> : vector<8x128xf32>
    %81 = tpu.matmul %73, %8, %cst_29 {dimension_numbers = #tpu.dot_dimension_numbers<[1], [0], [0], [1], [0, 0, 1, 1], [], []>} : vector<8x32xf32>, vector<32x128xf32>, vector<8x128xf32> -> vector<8x128xf32>
    %82 = arith.addf %80, %81 : vector<8x128xf32>
    %83 = vector.extract_strided_slice %82 {offsets = [0, 0], sizes = [8, 32], strides = [1, 1]} : vector<8x128xf32> to vector<8x32xf32>
    %84 = arith.negf %83 : vector<8x32xf32>
    %85 = math.exp %84 : vector<8x32xf32>
    %cst_30 = arith.constant 1.000000e+00 : f32
    %86 = vector.broadcast %cst_30 : f32 to vector<8x32xf32>
    %87 = arith.addf %86, %85 : vector<8x32xf32>
    %88 = arith.divf %86, %87 : vector<8x32xf32>
    %89 = vector.extract_strided_slice %82 {offsets = [0, 32], sizes = [8, 32], strides = [1, 1]} : vector<8x128xf32> to vector<8x32xf32>
    %90 = arith.negf %89 : vector<8x32xf32>
    %91 = math.exp %90 : vector<8x32xf32>
    %cst_31 = arith.constant 1.000000e+00 : f32
    %92 = vector.broadcast %cst_31 : f32 to vector<8x32xf32>
    %93 = arith.addf %92, %91 : vector<8x32xf32>
    %94 = arith.divf %92, %93 : vector<8x32xf32>
    %95 = vector.extract_strided_slice %82 {offsets = [0, 64], sizes = [8, 32], strides = [1, 1]} : vector<8x128xf32> to vector<8x32xf32>
    %96 = math.tanh %95 : vector<8x32xf32>
    %97 = vector.extract_strided_slice %82 {offsets = [0, 96], sizes = [8, 32], strides = [1, 1]} : vector<8x128xf32> to vector<8x32xf32>
    %98 = arith.negf %97 : vector<8x32xf32>
    %99 = math.exp %98 : vector<8x32xf32>
    %cst_32 = arith.constant 1.000000e+00 : f32
    %100 = vector.broadcast %cst_32 : f32 to vector<8x32xf32>
    %101 = arith.addf %100, %99 : vector<8x32xf32>
    %102 = arith.divf %100, %101 : vector<8x32xf32>
    %103 = arith.mulf %94, %71 : vector<8x32xf32>
    %104 = arith.mulf %88, %96 : vector<8x32xf32>
    %105 = arith.addf %103, %104 : vector<8x32xf32>
    %106 = math.tanh %105 : vector<8x32xf32>
    %107 = arith.mulf %102, %106 : vector<8x32xf32>
    %108 = arith.index_cast %c2_i32 : i32 to index
    %c0_33 = arith.constant 0 : index
    %c0_34 = arith.constant 0 : index
    %109 = vector.load %arg11[%108, %c0_33, %c0_34] : memref<8x8x32xf32, #tpu.memory_space<vmem>>, vector<1x8x32xf32>
    %110 = vector.shape_cast %109 : vector<1x8x32xf32> to vector<8x32xf32>
    %111 = vector.shape_cast %107 : vector<8x32xf32> to vector<1x8x32xf32>
    tpu.vector_store %arg11[%108, %c0_33, %c0_34], %111 {strides = array<i32>} : memref<8x8x32xf32, #tpu.memory_space<vmem>>, vector<1x8x32xf32>,
    %c3_i32 = arith.constant 3 : i32
    %112 = arith.index_cast %c3_i32 : i32 to index
    %c0_35 = arith.constant 0 : index
    %c0_36 = arith.constant 0 : index
    %113 = vector.load %arg10[%112, %c0_35, %c0_36] : memref<8x8x128xf32, #tpu.memory_space<vmem>>, vector<1x8x128xf32>
    %114 = vector.shape_cast %113 : vector<1x8x128xf32> to vector<8x128xf32>
    %cst_37 = arith.constant dense<0.000000e+00> : vector<8x128xf32>
    %115 = tpu.matmul %107, %8, %cst_37 {dimension_numbers = #tpu.dot_dimension_numbers<[1], [0], [0], [1], [0, 0, 1, 1], [], []>} : vector<8x32xf32>, vector<32x128xf32>, vector<8x128xf32> -> vector<8x128xf32>
    %116 = arith.addf %114, %115 : vector<8x128xf32>
    %117 = vector.extract_strided_slice %116 {offsets = [0, 0], sizes = [8, 32], strides = [1, 1]} : vector<8x128xf32> to vector<8x32xf32>
    %118 = arith.negf %117 : vector<8x32xf32>
    %119 = math.exp %118 : vector<8x32xf32>
    %cst_38 = arith.constant 1.000000e+00 : f32
    %120 = vector.broadcast %cst_38 : f32 to vector<8x32xf32>
    %121 = arith.addf %120, %119 : vector<8x32xf32>
    %122 = arith.divf %120, %121 : vector<8x32xf32>
    %123 = vector.extract_strided_slice %116 {offsets = [0, 32], sizes = [8, 32], strides = [1, 1]} : vector<8x128xf32> to vector<8x32xf32>
    %124 = arith.negf %123 : vector<8x32xf32>
    %125 = math.exp %124 : vector<8x32xf32>
    %cst_39 = arith.constant 1.000000e+00 : f32
    %126 = vector.broadcast %cst_39 : f32 to vector<8x32xf32>
    %127 = arith.addf %126, %125 : vector<8x32xf32>
    %128 = arith.divf %126, %127 : vector<8x32xf32>
    %129 = vector.extract_strided_slice %116 {offsets = [0, 64], sizes = [8, 32], strides = [1, 1]} : vector<8x128xf32> to vector<8x32xf32>
    %130 = math.tanh %129 : vector<8x32xf32>
    %131 = vector.extract_strided_slice %116 {offsets = [0, 96], sizes = [8, 32], strides = [1, 1]} : vector<8x128xf32> to vector<8x32xf32>
    %132 = arith.negf %131 : vector<8x32xf32>
    %133 = math.exp %132 : vector<8x32xf32>
    %cst_40 = arith.constant 1.000000e+00 : f32
    %134 = vector.broadcast %cst_40 : f32 to vector<8x32xf32>
    %135 = arith.addf %134, %133 : vector<8x32xf32>
    %136 = arith.divf %134, %135 : vector<8x32xf32>
    %137 = arith.mulf %128, %105 : vector<8x32xf32>
    %138 = arith.mulf %122, %130 : vector<8x32xf32>
    %139 = arith.addf %137, %138 : vector<8x32xf32>
    %140 = math.tanh %139 : vector<8x32xf32>
    %141 = arith.mulf %136, %140 : vector<8x32xf32>
    %142 = arith.index_cast %c3_i32 : i32 to index
    %c0_41 = arith.constant 0 : index
    %c0_42 = arith.constant 0 : index
    %143 = vector.load %arg11[%142, %c0_41, %c0_42] : memref<8x8x32xf32, #tpu.memory_space<vmem>>, vector<1x8x32xf32>
    %144 = vector.shape_cast %143 : vector<1x8x32xf32> to vector<8x32xf32>
    %145 = vector.shape_cast %141 : vector<8x32xf32> to vector<1x8x32xf32>
    tpu.vector_store %arg11[%142, %c0_41, %c0_42], %145 {strides = array<i32>} : memref<8x8x32xf32, #tpu.memory_space<vmem>>, vector<1x8x32xf32>,
    %c4_i32 = arith.constant 4 : i32
    %146 = arith.index_cast %c4_i32 : i32 to index
    %c0_43 = arith.constant 0 : index
    %c0_44 = arith.constant 0 : index
    %147 = vector.load %arg10[%146, %c0_43, %c0_44] : memref<8x8x128xf32, #tpu.memory_space<vmem>>, vector<1x8x128xf32>
    %148 = vector.shape_cast %147 : vector<1x8x128xf32> to vector<8x128xf32>
    %cst_45 = arith.constant dense<0.000000e+00> : vector<8x128xf32>
    %149 = tpu.matmul %141, %8, %cst_45 {dimension_numbers = #tpu.dot_dimension_numbers<[1], [0], [0], [1], [0, 0, 1, 1], [], []>} : vector<8x32xf32>, vector<32x128xf32>, vector<8x128xf32> -> vector<8x128xf32>
    %150 = arith.addf %148, %149 : vector<8x128xf32>
    %151 = vector.extract_strided_slice %150 {offsets = [0, 0], sizes = [8, 32], strides = [1, 1]} : vector<8x128xf32> to vector<8x32xf32>
    %152 = arith.negf %151 : vector<8x32xf32>
    %153 = math.exp %152 : vector<8x32xf32>
    %cst_46 = arith.constant 1.000000e+00 : f32
    %154 = vector.broadcast %cst_46 : f32 to vector<8x32xf32>
    %155 = arith.addf %154, %153 : vector<8x32xf32>
    %156 = arith.divf %154, %155 : vector<8x32xf32>
    %157 = vector.extract_strided_slice %150 {offsets = [0, 32], sizes = [8, 32], strides = [1, 1]} : vector<8x128xf32> to vector<8x32xf32>
    %158 = arith.negf %157 : vector<8x32xf32>
    %159 = math.exp %158 : vector<8x32xf32>
    %cst_47 = arith.constant 1.000000e+00 : f32
    %160 = vector.broadcast %cst_47 : f32 to vector<8x32xf32>
    %161 = arith.addf %160, %159 : vector<8x32xf32>
    %162 = arith.divf %160, %161 : vector<8x32xf32>
    %163 = vector.extract_strided_slice %150 {offsets = [0, 64], sizes = [8, 32], strides = [1, 1]} : vector<8x128xf32> to vector<8x32xf32>
    %164 = math.tanh %163 : vector<8x32xf32>
    %165 = vector.extract_strided_slice %150 {offsets = [0, 96], sizes = [8, 32], strides = [1, 1]} : vector<8x128xf32> to vector<8x32xf32>
    %166 = arith.negf %165 : vector<8x32xf32>
    %167 = math.exp %166 : vector<8x32xf32>
    %cst_48 = arith.constant 1.000000e+00 : f32
    %168 = vector.broadcast %cst_48 : f32 to vector<8x32xf32>
    %169 = arith.addf %168, %167 : vector<8x32xf32>
    %170 = arith.divf %168, %169 : vector<8x32xf32>
    %171 = arith.mulf %162, %139 : vector<8x32xf32>
    %172 = arith.mulf %156, %164 : vector<8x32xf32>
    %173 = arith.addf %171, %172 : vector<8x32xf32>
    %174 = math.tanh %173 : vector<8x32xf32>
    %175 = arith.mulf %170, %174 : vector<8x32xf32>
    %176 = arith.index_cast %c4_i32 : i32 to index
    %c0_49 = arith.constant 0 : index
    %c0_50 = arith.constant 0 : index
    %177 = vector.load %arg11[%176, %c0_49, %c0_50] : memref<8x8x32xf32, #tpu.memory_space<vmem>>, vector<1x8x32xf32>
    %178 = vector.shape_cast %177 : vector<1x8x32xf32> to vector<8x32xf32>
    %179 = vector.shape_cast %175 : vector<8x32xf32> to vector<1x8x32xf32>
    tpu.vector_store %arg11[%176, %c0_49, %c0_50], %179 {strides = array<i32>} : memref<8x8x32xf32, #tpu.memory_space<vmem>>, vector<1x8x32xf32>,
    %c5_i32 = arith.constant 5 : i32
    %180 = arith.index_cast %c5_i32 : i32 to index
    %c0_51 = arith.constant 0 : index
    %c0_52 = arith.constant 0 : index
    %181 = vector.load %arg10[%180, %c0_51, %c0_52] : memref<8x8x128xf32, #tpu.memory_space<vmem>>, vector<1x8x128xf32>
    %182 = vector.shape_cast %181 : vector<1x8x128xf32> to vector<8x128xf32>
    %cst_53 = arith.constant dense<0.000000e+00> : vector<8x128xf32>
    %183 = tpu.matmul %175, %8, %cst_53 {dimension_numbers = #tpu.dot_dimension_numbers<[1], [0], [0], [1], [0, 0, 1, 1], [], []>} : vector<8x32xf32>, vector<32x128xf32>, vector<8x128xf32> -> vector<8x128xf32>
    %184 = arith.addf %182, %183 : vector<8x128xf32>
    %185 = vector.extract_strided_slice %184 {offsets = [0, 0], sizes = [8, 32], strides = [1, 1]} : vector<8x128xf32> to vector<8x32xf32>
    %186 = arith.negf %185 : vector<8x32xf32>
    %187 = math.exp %186 : vector<8x32xf32>
    %cst_54 = arith.constant 1.000000e+00 : f32
    %188 = vector.broadcast %cst_54 : f32 to vector<8x32xf32>
    %189 = arith.addf %188, %187 : vector<8x32xf32>
    %190 = arith.divf %188, %189 : vector<8x32xf32>
    %191 = vector.extract_strided_slice %184 {offsets = [0, 32], sizes = [8, 32], strides = [1, 1]} : vector<8x128xf32> to vector<8x32xf32>
    %192 = arith.negf %191 : vector<8x32xf32>
    %193 = math.exp %192 : vector<8x32xf32>
    %cst_55 = arith.constant 1.000000e+00 : f32
    %194 = vector.broadcast %cst_55 : f32 to vector<8x32xf32>
    %195 = arith.addf %194, %193 : vector<8x32xf32>
    %196 = arith.divf %194, %195 : vector<8x32xf32>
    %197 = vector.extract_strided_slice %184 {offsets = [0, 64], sizes = [8, 32], strides = [1, 1]} : vector<8x128xf32> to vector<8x32xf32>
    %198 = math.tanh %197 : vector<8x32xf32>
    %199 = vector.extract_strided_slice %184 {offsets = [0, 96], sizes = [8, 32], strides = [1, 1]} : vector<8x128xf32> to vector<8x32xf32>
    %200 = arith.negf %199 : vector<8x32xf32>
    %201 = math.exp %200 : vector<8x32xf32>
    %cst_56 = arith.constant 1.000000e+00 : f32
    %202 = vector.broadcast %cst_56 : f32 to vector<8x32xf32>
    %203 = arith.addf %202, %201 : vector<8x32xf32>
    %204 = arith.divf %202, %203 : vector<8x32xf32>
    %205 = arith.mulf %196, %173 : vector<8x32xf32>
    %206 = arith.mulf %190, %198 : vector<8x32xf32>
    %207 = arith.addf %205, %206 : vector<8x32xf32>
    %208 = math.tanh %207 : vector<8x32xf32>
    %209 = arith.mulf %204, %208 : vector<8x32xf32>
    %210 = arith.index_cast %c5_i32 : i32 to index
    %c0_57 = arith.constant 0 : index
    %c0_58 = arith.constant 0 : index
    %211 = vector.load %arg11[%210, %c0_57, %c0_58] : memref<8x8x32xf32, #tpu.memory_space<vmem>>, vector<1x8x32xf32>
    %212 = vector.shape_cast %211 : vector<1x8x32xf32> to vector<8x32xf32>
    %213 = vector.shape_cast %209 : vector<8x32xf32> to vector<1x8x32xf32>
    tpu.vector_store %arg11[%210, %c0_57, %c0_58], %213 {strides = array<i32>} : memref<8x8x32xf32, #tpu.memory_space<vmem>>, vector<1x8x32xf32>,
    %c6_i32 = arith.constant 6 : i32
    %214 = arith.index_cast %c6_i32 : i32 to index
    %c0_59 = arith.constant 0 : index
    %c0_60 = arith.constant 0 : index
    %215 = vector.load %arg10[%214, %c0_59, %c0_60] : memref<8x8x128xf32, #tpu.memory_space<vmem>>, vector<1x8x128xf32>
    %216 = vector.shape_cast %215 : vector<1x8x128xf32> to vector<8x128xf32>
    %cst_61 = arith.constant dense<0.000000e+00> : vector<8x128xf32>
    %217 = tpu.matmul %209, %8, %cst_61 {dimension_numbers = #tpu.dot_dimension_numbers<[1], [0], [0], [1], [0, 0, 1, 1], [], []>} : vector<8x32xf32>, vector<32x128xf32>, vector<8x128xf32> -> vector<8x128xf32>
    %218 = arith.addf %216, %217 : vector<8x128xf32>
    %219 = vector.extract_strided_slice %218 {offsets = [0, 0], sizes = [8, 32], strides = [1, 1]} : vector<8x128xf32> to vector<8x32xf32>
    %220 = arith.negf %219 : vector<8x32xf32>
    %221 = math.exp %220 : vector<8x32xf32>
    %cst_62 = arith.constant 1.000000e+00 : f32
    %222 = vector.broadcast %cst_62 : f32 to vector<8x32xf32>
    %223 = arith.addf %222, %221 : vector<8x32xf32>
    %224 = arith.divf %222, %223 : vector<8x32xf32>
    %225 = vector.extract_strided_slice %218 {offsets = [0, 32], sizes = [8, 32], strides = [1, 1]} : vector<8x128xf32> to vector<8x32xf32>
    %226 = arith.negf %225 : vector<8x32xf32>
    %227 = math.exp %226 : vector<8x32xf32>
    %cst_63 = arith.constant 1.000000e+00 : f32
    %228 = vector.broadcast %cst_63 : f32 to vector<8x32xf32>
    %229 = arith.addf %228, %227 : vector<8x32xf32>
    %230 = arith.divf %228, %229 : vector<8x32xf32>
    %231 = vector.extract_strided_slice %218 {offsets = [0, 64], sizes = [8, 32], strides = [1, 1]} : vector<8x128xf32> to vector<8x32xf32>
    %232 = math.tanh %231 : vector<8x32xf32>
    %233 = vector.extract_strided_slice %218 {offsets = [0, 96], sizes = [8, 32], strides = [1, 1]} : vector<8x128xf32> to vector<8x32xf32>
    %234 = arith.negf %233 : vector<8x32xf32>
    %235 = math.exp %234 : vector<8x32xf32>
    %cst_64 = arith.constant 1.000000e+00 : f32
    %236 = vector.broadcast %cst_64 : f32 to vector<8x32xf32>
    %237 = arith.addf %236, %235 : vector<8x32xf32>
    %238 = arith.divf %236, %237 : vector<8x32xf32>
    %239 = arith.mulf %230, %207 : vector<8x32xf32>
    %240 = arith.mulf %224, %232 : vector<8x32xf32>
    %241 = arith.addf %239, %240 : vector<8x32xf32>
    %242 = math.tanh %241 : vector<8x32xf32>
    %243 = arith.mulf %238, %242 : vector<8x32xf32>
    %244 = arith.index_cast %c6_i32 : i32 to index
    %c0_65 = arith.constant 0 : index
    %c0_66 = arith.constant 0 : index
    %245 = vector.load %arg11[%244, %c0_65, %c0_66] : memref<8x8x32xf32, #tpu.memory_space<vmem>>, vector<1x8x32xf32>
    %246 = vector.shape_cast %245 : vector<1x8x32xf32> to vector<8x32xf32>
    %247 = vector.shape_cast %243 : vector<8x32xf32> to vector<1x8x32xf32>
    tpu.vector_store %arg11[%244, %c0_65, %c0_66], %247 {strides = array<i32>} : memref<8x8x32xf32, #tpu.memory_space<vmem>>, vector<1x8x32xf32>,
    %c7_i32 = arith.constant 7 : i32
    %248 = arith.index_cast %c7_i32 : i32 to index
    %c0_67 = arith.constant 0 : index
    %c0_68 = arith.constant 0 : index
    %249 = vector.load %arg10[%248, %c0_67, %c0_68] : memref<8x8x128xf32, #tpu.memory_space<vmem>>, vector<1x8x128xf32>
    %250 = vector.shape_cast %249 : vector<1x8x128xf32> to vector<8x128xf32>
    %cst_69 = arith.constant dense<0.000000e+00> : vector<8x128xf32>
    %251 = tpu.matmul %243, %8, %cst_69 {dimension_numbers = #tpu.dot_dimension_numbers<[1], [0], [0], [1], [0, 0, 1, 1], [], []>} : vector<8x32xf32>, vector<32x128xf32>, vector<8x128xf32> -> vector<8x128xf32>
    %252 = arith.addf %250, %251 : vector<8x128xf32>
    %253 = vector.extract_strided_slice %252 {offsets = [0, 0], sizes = [8, 32], strides = [1, 1]} : vector<8x128xf32> to vector<8x32xf32>
    %254 = arith.negf %253 : vector<8x32xf32>
    %255 = math.exp %254 : vector<8x32xf32>
    %cst_70 = arith.constant 1.000000e+00 : f32
    %256 = vector.broadcast %cst_70 : f32 to vector<8x32xf32>
    %257 = arith.addf %256, %255 : vector<8x32xf32>
    %258 = arith.divf %256, %257 : vector<8x32xf32>
    %259 = vector.extract_strided_slice %252 {offsets = [0, 32], sizes = [8, 32], strides = [1, 1]} : vector<8x128xf32> to vector<8x32xf32>
    %260 = arith.negf %259 : vector<8x32xf32>
    %261 = math.exp %260 : vector<8x32xf32>
    %cst_71 = arith.constant 1.000000e+00 : f32
    %262 = vector.broadcast %cst_71 : f32 to vector<8x32xf32>
    %263 = arith.addf %262, %261 : vector<8x32xf32>
    %264 = arith.divf %262, %263 : vector<8x32xf32>
    %265 = vector.extract_strided_slice %252 {offsets = [0, 64], sizes = [8, 32], strides = [1, 1]} : vector<8x128xf32> to vector<8x32xf32>
    %266 = math.tanh %265 : vector<8x32xf32>
    %267 = vector.extract_strided_slice %252 {offsets = [0, 96], sizes = [8, 32], strides = [1, 1]} : vector<8x128xf32> to vector<8x32xf32>
    %268 = arith.negf %267 : vector<8x32xf32>
    %269 = math.exp %268 : vector<8x32xf32>
    %cst_72 = arith.constant 1.000000e+00 : f32
    %270 = vector.broadcast %cst_72 : f32 to vector<8x32xf32>
    %271 = arith.addf %270, %269 : vector<8x32xf32>
    %272 = arith.divf %270, %271 : vector<8x32xf32>
    %273 = arith.mulf %264, %241 : vector<8x32xf32>
    %274 = arith.mulf %258, %266 : vector<8x32xf32>
    %275 = arith.addf %273, %274 : vector<8x32xf32>
    %276 = math.tanh %275 : vector<8x32xf32>
    %277 = arith.mulf %272, %276 : vector<8x32xf32>
    %278 = arith.index_cast %c7_i32 : i32 to index
    %c0_73 = arith.constant 0 : index
    %c0_74 = arith.constant 0 : index
    %279 = vector.load %arg11[%278, %c0_73, %c0_74] : memref<8x8x32xf32, #tpu.memory_space<vmem>>, vector<1x8x32xf32>
    %280 = vector.shape_cast %279 : vector<1x8x32xf32> to vector<8x32xf32>
    %281 = vector.shape_cast %277 : vector<8x32xf32> to vector<1x8x32xf32>
    tpu.vector_store %arg11[%278, %c0_73, %c0_74], %281 {strides = array<i32>} : memref<8x8x32xf32, #tpu.memory_space<vmem>>, vector<1x8x32xf32>,
    %c8_i32 = arith.constant 8 : i32
    %c0_75 = arith.constant 0 : index
    %c0_76 = arith.constant 0 : index
    %c0_77 = arith.constant 0 : index
    %282 = vector.load %arg11[%c0_75, %c0_76, %c0_77] : memref<8x8x32xf32, #tpu.memory_space<vmem>>, vector<8x8x32xf32>
    %283 = vector.shape_cast %282 : vector<8x8x32xf32> to vector<64x32xf32>
    %c0_78 = arith.constant 0 : index
    %c0_79 = arith.constant 0 : index
    %284 = vector.load %arg4[%c0_78, %c0_79] : memref<32x128xf32, #tpu.memory_space<vmem>>, vector<32x128xf32>
    %cst_80 = arith.constant dense<0.000000e+00> : vector<64x128xf32>
    %285 = tpu.matmul %283, %284, %cst_80 {dimension_numbers = #tpu.dot_dimension_numbers<[1], [0], [0], [1], [0, 0, 1, 1], [], []>} : vector<64x32xf32>, vector<32x128xf32>, vector<64x128xf32> -> vector<64x128xf32>
    %c0_81 = arith.constant 0 : index
    %c0_82 = arith.constant 0 : index
    %286 = vector.load %arg6[%c0_81, %c0_82] : memref<1x128xf32, #tpu.memory_space<vmem>>, vector<1x128xf32>
    %287 = vector.broadcast %286 : vector<1x128xf32> to vector<64x128xf32>
    %288 = arith.addf %285, %287 : vector<64x128xf32>
    %289 = vector.shape_cast %288 : vector<64x128xf32> to vector<8x8x128xf32>
    %c0_83 = arith.constant 0 : index
    %c0_84 = arith.constant 0 : index
    %c0_85 = arith.constant 0 : index
    %290 = vector.load %arg10[%c0_83, %c0_84, %c0_85] : memref<8x8x128xf32, #tpu.memory_space<vmem>>, vector<8x8x128xf32>
    tpu.vector_store %arg10[%c0_83, %c0_84, %c0_85], %289 {strides = array<i32>} : memref<8x8x128xf32, #tpu.memory_space<vmem>>, vector<8x8x128xf32>,
    %c0_86 = arith.constant 0 : index
    %c0_87 = arith.constant 0 : index
    %291 = vector.load %arg5[%c0_86, %c0_87] : memref<32x128xf32, #tpu.memory_space<vmem>>, vector<32x128xf32>
    %cst_88 = arith.constant 0.000000e+00 : f32
    %292 = vector.broadcast %cst_88 : f32 to vector<8x32xf32>
    %c0_i32_89 = arith.constant 0 : i32
    %293 = arith.index_cast %c0_i32_89 : i32 to index
    %c0_90 = arith.constant 0 : index
    %c0_91 = arith.constant 0 : index
    %294 = vector.load %arg10[%293, %c0_90, %c0_91] : memref<8x8x128xf32, #tpu.memory_space<vmem>>, vector<1x8x128xf32>
    %295 = vector.shape_cast %294 : vector<1x8x128xf32> to vector<8x128xf32>
    %cst_92 = arith.constant dense<0.000000e+00> : vector<8x128xf32>
    %296 = tpu.matmul %292, %291, %cst_92 {dimension_numbers = #tpu.dot_dimension_numbers<[1], [0], [0], [1], [0, 0, 1, 1], [], []>} : vector<8x32xf32>, vector<32x128xf32>, vector<8x128xf32> -> vector<8x128xf32>
    %297 = arith.addf %295, %296 : vector<8x128xf32>
    %298 = vector.extract_strided_slice %297 {offsets = [0, 0], sizes = [8, 32], strides = [1, 1]} : vector<8x128xf32> to vector<8x32xf32>
    %299 = arith.negf %298 : vector<8x32xf32>
    %300 = math.exp %299 : vector<8x32xf32>
    %cst_93 = arith.constant 1.000000e+00 : f32
    %301 = vector.broadcast %cst_93 : f32 to vector<8x32xf32>
    %302 = arith.addf %301, %300 : vector<8x32xf32>
    %303 = arith.divf %301, %302 : vector<8x32xf32>
    %304 = vector.extract_strided_slice %297 {offsets = [0, 32], sizes = [8, 32], strides = [1, 1]} : vector<8x128xf32> to vector<8x32xf32>
    %305 = arith.negf %304 : vector<8x32xf32>
    %306 = math.exp %305 : vector<8x32xf32>
    %cst_94 = arith.constant 1.000000e+00 : f32
    %307 = vector.broadcast %cst_94 : f32 to vector<8x32xf32>
    %308 = arith.addf %307, %306 : vector<8x32xf32>
    %309 = arith.divf %307, %308 : vector<8x32xf32>
    %310 = vector.extract_strided_slice %297 {offsets = [0, 64], sizes = [8, 32], strides = [1, 1]} : vector<8x128xf32> to vector<8x32xf32>
    %311 = math.tanh %310 : vector<8x32xf32>
    %312 = vector.extract_strided_slice %297 {offsets = [0, 96], sizes = [8, 32], strides = [1, 1]} : vector<8x128xf32> to vector<8x32xf32>
    %313 = arith.negf %312 : vector<8x32xf32>
    %314 = math.exp %313 : vector<8x32xf32>
    %cst_95 = arith.constant 1.000000e+00 : f32
    %315 = vector.broadcast %cst_95 : f32 to vector<8x32xf32>
    %316 = arith.addf %315, %314 : vector<8x32xf32>
    %317 = arith.divf %315, %316 : vector<8x32xf32>
    %318 = arith.mulf %309, %292 : vector<8x32xf32>
    %319 = arith.mulf %303, %311 : vector<8x32xf32>
    %320 = arith.addf %318, %319 : vector<8x32xf32>
    %321 = math.tanh %320 : vector<8x32xf32>
    %322 = arith.mulf %317, %321 : vector<8x32xf32>
    %c1_i32_96 = arith.constant 1 : i32
    %323 = arith.index_cast %c1_i32_96 : i32 to index
    %c0_97 = arith.constant 0 : index
    %c0_98 = arith.constant 0 : index
    %324 = vector.load %arg10[%323, %c0_97, %c0_98] : memref<8x8x128xf32, #tpu.memory_space<vmem>>, vector<1x8x128xf32>
    %325 = vector.shape_cast %324 : vector<1x8x128xf32> to vector<8x128xf32>
    %cst_99 = arith.constant dense<0.000000e+00> : vector<8x128xf32>
    %326 = tpu.matmul %322, %291, %cst_99 {dimension_numbers = #tpu.dot_dimension_numbers<[1], [0], [0], [1], [0, 0, 1, 1], [], []>} : vector<8x32xf32>, vector<32x128xf32>, vector<8x128xf32> -> vector<8x128xf32>
    %327 = arith.addf %325, %326 : vector<8x128xf32>
    %328 = vector.extract_strided_slice %327 {offsets = [0, 0], sizes = [8, 32], strides = [1, 1]} : vector<8x128xf32> to vector<8x32xf32>
    %329 = arith.negf %328 : vector<8x32xf32>
    %330 = math.exp %329 : vector<8x32xf32>
    %cst_100 = arith.constant 1.000000e+00 : f32
    %331 = vector.broadcast %cst_100 : f32 to vector<8x32xf32>
    %332 = arith.addf %331, %330 : vector<8x32xf32>
    %333 = arith.divf %331, %332 : vector<8x32xf32>
    %334 = vector.extract_strided_slice %327 {offsets = [0, 32], sizes = [8, 32], strides = [1, 1]} : vector<8x128xf32> to vector<8x32xf32>
    %335 = arith.negf %334 : vector<8x32xf32>
    %336 = math.exp %335 : vector<8x32xf32>
    %cst_101 = arith.constant 1.000000e+00 : f32
    %337 = vector.broadcast %cst_101 : f32 to vector<8x32xf32>
    %338 = arith.addf %337, %336 : vector<8x32xf32>
    %339 = arith.divf %337, %338 : vector<8x32xf32>
    %340 = vector.extract_strided_slice %327 {offsets = [0, 64], sizes = [8, 32], strides = [1, 1]} : vector<8x128xf32> to vector<8x32xf32>
    %341 = math.tanh %340 : vector<8x32xf32>
    %342 = vector.extract_strided_slice %327 {offsets = [0, 96], sizes = [8, 32], strides = [1, 1]} : vector<8x128xf32> to vector<8x32xf32>
    %343 = arith.negf %342 : vector<8x32xf32>
    %344 = math.exp %343 : vector<8x32xf32>
    %cst_102 = arith.constant 1.000000e+00 : f32
    %345 = vector.broadcast %cst_102 : f32 to vector<8x32xf32>
    %346 = arith.addf %345, %344 : vector<8x32xf32>
    %347 = arith.divf %345, %346 : vector<8x32xf32>
    %348 = arith.mulf %339, %320 : vector<8x32xf32>
    %349 = arith.mulf %333, %341 : vector<8x32xf32>
    %350 = arith.addf %348, %349 : vector<8x32xf32>
    %351 = math.tanh %350 : vector<8x32xf32>
    %352 = arith.mulf %347, %351 : vector<8x32xf32>
    %c2_i32_103 = arith.constant 2 : i32
    %353 = arith.index_cast %c2_i32_103 : i32 to index
    %c0_104 = arith.constant 0 : index
    %c0_105 = arith.constant 0 : index
    %354 = vector.load %arg10[%353, %c0_104, %c0_105] : memref<8x8x128xf32, #tpu.memory_space<vmem>>, vector<1x8x128xf32>
    %355 = vector.shape_cast %354 : vector<1x8x128xf32> to vector<8x128xf32>
    %cst_106 = arith.constant dense<0.000000e+00> : vector<8x128xf32>
    %356 = tpu.matmul %352, %291, %cst_106 {dimension_numbers = #tpu.dot_dimension_numbers<[1], [0], [0], [1], [0, 0, 1, 1], [], []>} : vector<8x32xf32>, vector<32x128xf32>, vector<8x128xf32> -> vector<8x128xf32>
    %357 = arith.addf %355, %356 : vector<8x128xf32>
    %358 = vector.extract_strided_slice %357 {offsets = [0, 0], sizes = [8, 32], strides = [1, 1]} : vector<8x128xf32> to vector<8x32xf32>
    %359 = arith.negf %358 : vector<8x32xf32>
    %360 = math.exp %359 : vector<8x32xf32>
    %cst_107 = arith.constant 1.000000e+00 : f32
    %361 = vector.broadcast %cst_107 : f32 to vector<8x32xf32>
    %362 = arith.addf %361, %360 : vector<8x32xf32>
    %363 = arith.divf %361, %362 : vector<8x32xf32>
    %364 = vector.extract_strided_slice %357 {offsets = [0, 32], sizes = [8, 32], strides = [1, 1]} : vector<8x128xf32> to vector<8x32xf32>
    %365 = arith.negf %364 : vector<8x32xf32>
    %366 = math.exp %365 : vector<8x32xf32>
    %cst_108 = arith.constant 1.000000e+00 : f32
    %367 = vector.broadcast %cst_108 : f32 to vector<8x32xf32>
    %368 = arith.addf %367, %366 : vector<8x32xf32>
    %369 = arith.divf %367, %368 : vector<8x32xf32>
    %370 = vector.extract_strided_slice %357 {offsets = [0, 64], sizes = [8, 32], strides = [1, 1]} : vector<8x128xf32> to vector<8x32xf32>
    %371 = math.tanh %370 : vector<8x32xf32>
    %372 = vector.extract_strided_slice %357 {offsets = [0, 96], sizes = [8, 32], strides = [1, 1]} : vector<8x128xf32> to vector<8x32xf32>
    %373 = arith.negf %372 : vector<8x32xf32>
    %374 = math.exp %373 : vector<8x32xf32>
    %cst_109 = arith.constant 1.000000e+00 : f32
    %375 = vector.broadcast %cst_109 : f32 to vector<8x32xf32>
    %376 = arith.addf %375, %374 : vector<8x32xf32>
    %377 = arith.divf %375, %376 : vector<8x32xf32>
    %378 = arith.mulf %369, %350 : vector<8x32xf32>
    %379 = arith.mulf %363, %371 : vector<8x32xf32>
    %380 = arith.addf %378, %379 : vector<8x32xf32>
    %381 = math.tanh %380 : vector<8x32xf32>
    %382 = arith.mulf %377, %381 : vector<8x32xf32>
    %c3_i32_110 = arith.constant 3 : i32
    %383 = arith.index_cast %c3_i32_110 : i32 to index
    %c0_111 = arith.constant 0 : index
    %c0_112 = arith.constant 0 : index
    %384 = vector.load %arg10[%383, %c0_111, %c0_112] : memref<8x8x128xf32, #tpu.memory_space<vmem>>, vector<1x8x128xf32>
    %385 = vector.shape_cast %384 : vector<1x8x128xf32> to vector<8x128xf32>
    %cst_113 = arith.constant dense<0.000000e+00> : vector<8x128xf32>
    %386 = tpu.matmul %382, %291, %cst_113 {dimension_numbers = #tpu.dot_dimension_numbers<[1], [0], [0], [1], [0, 0, 1, 1], [], []>} : vector<8x32xf32>, vector<32x128xf32>, vector<8x128xf32> -> vector<8x128xf32>
    %387 = arith.addf %385, %386 : vector<8x128xf32>
    %388 = vector.extract_strided_slice %387 {offsets = [0, 0], sizes = [8, 32], strides = [1, 1]} : vector<8x128xf32> to vector<8x32xf32>
    %389 = arith.negf %388 : vector<8x32xf32>
    %390 = math.exp %389 : vector<8x32xf32>
    %cst_114 = arith.constant 1.000000e+00 : f32
    %391 = vector.broadcast %cst_114 : f32 to vector<8x32xf32>
    %392 = arith.addf %391, %390 : vector<8x32xf32>
    %393 = arith.divf %391, %392 : vector<8x32xf32>
    %394 = vector.extract_strided_slice %387 {offsets = [0, 32], sizes = [8, 32], strides = [1, 1]} : vector<8x128xf32> to vector<8x32xf32>
    %395 = arith.negf %394 : vector<8x32xf32>
    %396 = math.exp %395 : vector<8x32xf32>
    %cst_115 = arith.constant 1.000000e+00 : f32
    %397 = vector.broadcast %cst_115 : f32 to vector<8x32xf32>
    %398 = arith.addf %397, %396 : vector<8x32xf32>
    %399 = arith.divf %397, %398 : vector<8x32xf32>
    %400 = vector.extract_strided_slice %387 {offsets = [0, 64], sizes = [8, 32], strides = [1, 1]} : vector<8x128xf32> to vector<8x32xf32>
    %401 = math.tanh %400 : vector<8x32xf32>
    %402 = vector.extract_strided_slice %387 {offsets = [0, 96], sizes = [8, 32], strides = [1, 1]} : vector<8x128xf32> to vector<8x32xf32>
    %403 = arith.negf %402 : vector<8x32xf32>
    %404 = math.exp %403 : vector<8x32xf32>
    %cst_116 = arith.constant 1.000000e+00 : f32
    %405 = vector.broadcast %cst_116 : f32 to vector<8x32xf32>
    %406 = arith.addf %405, %404 : vector<8x32xf32>
    %407 = arith.divf %405, %406 : vector<8x32xf32>
    %408 = arith.mulf %399, %380 : vector<8x32xf32>
    %409 = arith.mulf %393, %401 : vector<8x32xf32>
    %410 = arith.addf %408, %409 : vector<8x32xf32>
    %411 = math.tanh %410 : vector<8x32xf32>
    %412 = arith.mulf %407, %411 : vector<8x32xf32>
    %c4_i32_117 = arith.constant 4 : i32
    %413 = arith.index_cast %c4_i32_117 : i32 to index
    %c0_118 = arith.constant 0 : index
    %c0_119 = arith.constant 0 : index
    %414 = vector.load %arg10[%413, %c0_118, %c0_119] : memref<8x8x128xf32, #tpu.memory_space<vmem>>, vector<1x8x128xf32>
    %415 = vector.shape_cast %414 : vector<1x8x128xf32> to vector<8x128xf32>
    %cst_120 = arith.constant dense<0.000000e+00> : vector<8x128xf32>
    %416 = tpu.matmul %412, %291, %cst_120 {dimension_numbers = #tpu.dot_dimension_numbers<[1], [0], [0], [1], [0, 0, 1, 1], [], []>} : vector<8x32xf32>, vector<32x128xf32>, vector<8x128xf32> -> vector<8x128xf32>
    %417 = arith.addf %415, %416 : vector<8x128xf32>
    %418 = vector.extract_strided_slice %417 {offsets = [0, 0], sizes = [8, 32], strides = [1, 1]} : vector<8x128xf32> to vector<8x32xf32>
    %419 = arith.negf %418 : vector<8x32xf32>
    %420 = math.exp %419 : vector<8x32xf32>
    %cst_121 = arith.constant 1.000000e+00 : f32
    %421 = vector.broadcast %cst_121 : f32 to vector<8x32xf32>
    %422 = arith.addf %421, %420 : vector<8x32xf32>
    %423 = arith.divf %421, %422 : vector<8x32xf32>
    %424 = vector.extract_strided_slice %417 {offsets = [0, 32], sizes = [8, 32], strides = [1, 1]} : vector<8x128xf32> to vector<8x32xf32>
    %425 = arith.negf %424 : vector<8x32xf32>
    %426 = math.exp %425 : vector<8x32xf32>
    %cst_122 = arith.constant 1.000000e+00 : f32
    %427 = vector.broadcast %cst_122 : f32 to vector<8x32xf32>
    %428 = arith.addf %427, %426 : vector<8x32xf32>
    %429 = arith.divf %427, %428 : vector<8x32xf32>
    %430 = vector.extract_strided_slice %417 {offsets = [0, 64], sizes = [8, 32], strides = [1, 1]} : vector<8x128xf32> to vector<8x32xf32>
    %431 = math.tanh %430 : vector<8x32xf32>
    %432 = vector.extract_strided_slice %417 {offsets = [0, 96], sizes = [8, 32], strides = [1, 1]} : vector<8x128xf32> to vector<8x32xf32>
    %433 = arith.negf %432 : vector<8x32xf32>
    %434 = math.exp %433 : vector<8x32xf32>
    %cst_123 = arith.constant 1.000000e+00 : f32
    %435 = vector.broadcast %cst_123 : f32 to vector<8x32xf32>
    %436 = arith.addf %435, %434 : vector<8x32xf32>
    %437 = arith.divf %435, %436 : vector<8x32xf32>
    %438 = arith.mulf %429, %410 : vector<8x32xf32>
    %439 = arith.mulf %423, %431 : vector<8x32xf32>
    %440 = arith.addf %438, %439 : vector<8x32xf32>
    %441 = math.tanh %440 : vector<8x32xf32>
    %442 = arith.mulf %437, %441 : vector<8x32xf32>
    %c5_i32_124 = arith.constant 5 : i32
    %443 = arith.index_cast %c5_i32_124 : i32 to index
    %c0_125 = arith.constant 0 : index
    %c0_126 = arith.constant 0 : index
    %444 = vector.load %arg10[%443, %c0_125, %c0_126] : memref<8x8x128xf32, #tpu.memory_space<vmem>>, vector<1x8x128xf32>
    %445 = vector.shape_cast %444 : vector<1x8x128xf32> to vector<8x128xf32>
    %cst_127 = arith.constant dense<0.000000e+00> : vector<8x128xf32>
    %446 = tpu.matmul %442, %291, %cst_127 {dimension_numbers = #tpu.dot_dimension_numbers<[1], [0], [0], [1], [0, 0, 1, 1], [], []>} : vector<8x32xf32>, vector<32x128xf32>, vector<8x128xf32> -> vector<8x128xf32>
    %447 = arith.addf %445, %446 : vector<8x128xf32>
    %448 = vector.extract_strided_slice %447 {offsets = [0, 0], sizes = [8, 32], strides = [1, 1]} : vector<8x128xf32> to vector<8x32xf32>
    %449 = arith.negf %448 : vector<8x32xf32>
    %450 = math.exp %449 : vector<8x32xf32>
    %cst_128 = arith.constant 1.000000e+00 : f32
    %451 = vector.broadcast %cst_128 : f32 to vector<8x32xf32>
    %452 = arith.addf %451, %450 : vector<8x32xf32>
    %453 = arith.divf %451, %452 : vector<8x32xf32>
    %454 = vector.extract_strided_slice %447 {offsets = [0, 32], sizes = [8, 32], strides = [1, 1]} : vector<8x128xf32> to vector<8x32xf32>
    %455 = arith.negf %454 : vector<8x32xf32>
    %456 = math.exp %455 : vector<8x32xf32>
    %cst_129 = arith.constant 1.000000e+00 : f32
    %457 = vector.broadcast %cst_129 : f32 to vector<8x32xf32>
    %458 = arith.addf %457, %456 : vector<8x32xf32>
    %459 = arith.divf %457, %458 : vector<8x32xf32>
    %460 = vector.extract_strided_slice %447 {offsets = [0, 64], sizes = [8, 32], strides = [1, 1]} : vector<8x128xf32> to vector<8x32xf32>
    %461 = math.tanh %460 : vector<8x32xf32>
    %462 = vector.extract_strided_slice %447 {offsets = [0, 96], sizes = [8, 32], strides = [1, 1]} : vector<8x128xf32> to vector<8x32xf32>
    %463 = arith.negf %462 : vector<8x32xf32>
    %464 = math.exp %463 : vector<8x32xf32>
    %cst_130 = arith.constant 1.000000e+00 : f32
    %465 = vector.broadcast %cst_130 : f32 to vector<8x32xf32>
    %466 = arith.addf %465, %464 : vector<8x32xf32>
    %467 = arith.divf %465, %466 : vector<8x32xf32>
    %468 = arith.mulf %459, %440 : vector<8x32xf32>
    %469 = arith.mulf %453, %461 : vector<8x32xf32>
    %470 = arith.addf %468, %469 : vector<8x32xf32>
    %471 = math.tanh %470 : vector<8x32xf32>
    %472 = arith.mulf %467, %471 : vector<8x32xf32>
    %c6_i32_131 = arith.constant 6 : i32
    %473 = arith.index_cast %c6_i32_131 : i32 to index
    %c0_132 = arith.constant 0 : index
    %c0_133 = arith.constant 0 : index
    %474 = vector.load %arg10[%473, %c0_132, %c0_133] : memref<8x8x128xf32, #tpu.memory_space<vmem>>, vector<1x8x128xf32>
    %475 = vector.shape_cast %474 : vector<1x8x128xf32> to vector<8x128xf32>
    %cst_134 = arith.constant dense<0.000000e+00> : vector<8x128xf32>
    %476 = tpu.matmul %472, %291, %cst_134 {dimension_numbers = #tpu.dot_dimension_numbers<[1], [0], [0], [1], [0, 0, 1, 1], [], []>} : vector<8x32xf32>, vector<32x128xf32>, vector<8x128xf32> -> vector<8x128xf32>
    %477 = arith.addf %475, %476 : vector<8x128xf32>
    %478 = vector.extract_strided_slice %477 {offsets = [0, 0], sizes = [8, 32], strides = [1, 1]} : vector<8x128xf32> to vector<8x32xf32>
    %479 = arith.negf %478 : vector<8x32xf32>
    %480 = math.exp %479 : vector<8x32xf32>
    %cst_135 = arith.constant 1.000000e+00 : f32
    %481 = vector.broadcast %cst_135 : f32 to vector<8x32xf32>
    %482 = arith.addf %481, %480 : vector<8x32xf32>
    %483 = arith.divf %481, %482 : vector<8x32xf32>
    %484 = vector.extract_strided_slice %477 {offsets = [0, 32], sizes = [8, 32], strides = [1, 1]} : vector<8x128xf32> to vector<8x32xf32>
    %485 = arith.negf %484 : vector<8x32xf32>
    %486 = math.exp %485 : vector<8x32xf32>
    %cst_136 = arith.constant 1.000000e+00 : f32
    %487 = vector.broadcast %cst_136 : f32 to vector<8x32xf32>
    %488 = arith.addf %487, %486 : vector<8x32xf32>
    %489 = arith.divf %487, %488 : vector<8x32xf32>
    %490 = vector.extract_strided_slice %477 {offsets = [0, 64], sizes = [8, 32], strides = [1, 1]} : vector<8x128xf32> to vector<8x32xf32>
    %491 = math.tanh %490 : vector<8x32xf32>
    %492 = vector.extract_strided_slice %477 {offsets = [0, 96], sizes = [8, 32], strides = [1, 1]} : vector<8x128xf32> to vector<8x32xf32>
    %493 = arith.negf %492 : vector<8x32xf32>
    %494 = math.exp %493 : vector<8x32xf32>
    %cst_137 = arith.constant 1.000000e+00 : f32
    %495 = vector.broadcast %cst_137 : f32 to vector<8x32xf32>
    %496 = arith.addf %495, %494 : vector<8x32xf32>
    %497 = arith.divf %495, %496 : vector<8x32xf32>
    %498 = arith.mulf %489, %470 : vector<8x32xf32>
    %499 = arith.mulf %483, %491 : vector<8x32xf32>
    %500 = arith.addf %498, %499 : vector<8x32xf32>
    %501 = math.tanh %500 : vector<8x32xf32>
    %502 = arith.mulf %497, %501 : vector<8x32xf32>
    %c7_i32_138 = arith.constant 7 : i32
    %503 = arith.index_cast %c7_i32_138 : i32 to index
    %c0_139 = arith.constant 0 : index
    %c0_140 = arith.constant 0 : index
    %504 = vector.load %arg10[%503, %c0_139, %c0_140] : memref<8x8x128xf32, #tpu.memory_space<vmem>>, vector<1x8x128xf32>
    %505 = vector.shape_cast %504 : vector<1x8x128xf32> to vector<8x128xf32>
    %cst_141 = arith.constant dense<0.000000e+00> : vector<8x128xf32>
    %506 = tpu.matmul %502, %291, %cst_141 {dimension_numbers = #tpu.dot_dimension_numbers<[1], [0], [0], [1], [0, 0, 1, 1], [], []>} : vector<8x32xf32>, vector<32x128xf32>, vector<8x128xf32> -> vector<8x128xf32>
    %507 = arith.addf %505, %506 : vector<8x128xf32>
    %508 = vector.extract_strided_slice %507 {offsets = [0, 0], sizes = [8, 32], strides = [1, 1]} : vector<8x128xf32> to vector<8x32xf32>
    %509 = arith.negf %508 : vector<8x32xf32>
    %510 = math.exp %509 : vector<8x32xf32>
    %cst_142 = arith.constant 1.000000e+00 : f32
    %511 = vector.broadcast %cst_142 : f32 to vector<8x32xf32>
    %512 = arith.addf %511, %510 : vector<8x32xf32>
    %513 = arith.divf %511, %512 : vector<8x32xf32>
    %514 = vector.extract_strided_slice %507 {offsets = [0, 32], sizes = [8, 32], strides = [1, 1]} : vector<8x128xf32> to vector<8x32xf32>
    %515 = arith.negf %514 : vector<8x32xf32>
    %516 = math.exp %515 : vector<8x32xf32>
    %cst_143 = arith.constant 1.000000e+00 : f32
    %517 = vector.broadcast %cst_143 : f32 to vector<8x32xf32>
    %518 = arith.addf %517, %516 : vector<8x32xf32>
    %519 = arith.divf %517, %518 : vector<8x32xf32>
    %520 = vector.extract_strided_slice %507 {offsets = [0, 64], sizes = [8, 32], strides = [1, 1]} : vector<8x128xf32> to vector<8x32xf32>
    %521 = math.tanh %520 : vector<8x32xf32>
    %522 = vector.extract_strided_slice %507 {offsets = [0, 96], sizes = [8, 32], strides = [1, 1]} : vector<8x128xf32> to vector<8x32xf32>
    %523 = arith.negf %522 : vector<8x32xf32>
    %524 = math.exp %523 : vector<8x32xf32>
    %cst_144 = arith.constant 1.000000e+00 : f32
    %525 = vector.broadcast %cst_144 : f32 to vector<8x32xf32>
    %526 = arith.addf %525, %524 : vector<8x32xf32>
    %527 = arith.divf %525, %526 : vector<8x32xf32>
    %528 = arith.mulf %519, %500 : vector<8x32xf32>
    %529 = arith.mulf %513, %521 : vector<8x32xf32>
    %530 = arith.addf %528, %529 : vector<8x32xf32>
    %531 = math.tanh %530 : vector<8x32xf32>
    %532 = arith.mulf %527, %531 : vector<8x32xf32>
    %c8_i32_145 = arith.constant 8 : i32
    %cst_146 = arith.constant 0.000000e+00 : f32
    %533 = vector.broadcast %cst_146 : f32 to vector<8x32xf32>
    %534 = arith.maximumf %532, %533 : vector<8x32xf32>
    %c0_147 = arith.constant 0 : index
    %c0_148 = arith.constant 0 : index
    %535 = vector.load %arg7[%c0_147, %c0_148] : memref<32x4xf32, #tpu.memory_space<vmem>>, vector<32x4xf32>
    %cst_149 = arith.constant dense<0.000000e+00> : vector<8x4xf32>
    %536 = tpu.matmul %534, %535, %cst_149 {dimension_numbers = #tpu.dot_dimension_numbers<[1], [0], [0], [1], [0, 0, 1, 1], [], []>} : vector<8x32xf32>, vector<32x4xf32>, vector<8x4xf32> -> vector<8x4xf32>
    %c0_150 = arith.constant 0 : index
    %c0_151 = arith.constant 0 : index
    %537 = vector.load %arg8[%c0_150, %c0_151] : memref<1x4xf32, #tpu.memory_space<vmem>>, vector<1x4xf32>
    %538 = vector.broadcast %537 : vector<1x4xf32> to vector<8x4xf32>
    %539 = arith.addf %536, %538 : vector<8x4xf32>
    %c0_152 = arith.constant 0 : index
    %c0_153 = arith.constant 0 : index
    %540 = vector.load %arg9[%c0_152, %c0_153] : memref<8x4xf32, #tpu.memory_space<vmem>>, vector<8x4xf32>
    tpu.vector_store %arg9[%c0_152, %c0_153], %539 {strides = array<i32>} : memref<8x4xf32, #tpu.memory_space<vmem>>, vector<8x4xf32>,
    return
  }
}

</mosaic_0001>

<llo_original>
// kernel: lstm_net_forward.1
$region0: #{lstm_net_forward.1}
  #allocation0 [shape = 'u32[]', space=smem, size = 0x4, offset = 0x4, fixed_abs, tag = 'smem constant byte address 0x4 - core index']
  #allocation1 [shape = 'u32[144,128]{1,0:T(1,128)}', space=vmem, size = 0x12000, scoped, tag = 'internal scratch']
  #allocation2 [shape = 'f32[8,8,128]{2,1,0:T(8,128)}', space=vmem, size = 0x8000, scoped, tag = 'scratch operand']
  #allocation3 [shape = 'f32[8,8,32]{2,1,0:T(8,128)}', space=vmem, size = 0x8000, scoped, tag = 'scratch operand']
  %s0 = inlined_call_operand.vmem [shape: f32[64,16], index: 0, kind: input, shape index: {}]
  %s1 = inlined_call_operand.vmem [shape: f32[16,128], index: 1, kind: input, shape index: {}]
  %s2 = inlined_call_operand.vmem [shape: f32[32,128], index: 2, kind: input, shape index: {}]
  %s3 = inlined_call_operand.vmem [shape: f32[1,128], index: 3, kind: input, shape index: {}]
  %s4 = inlined_call_operand.vmem [shape: f32[32,128], index: 4, kind: input, shape index: {}]
  %s5 = inlined_call_operand.vmem [shape: f32[32,128], index: 5, kind: input, shape index: {}]
  %s6 = inlined_call_operand.vmem [shape: f32[1,128], index: 6, kind: input, shape index: {}]
  %s7 = inlined_call_operand.vmem [shape: f32[32,4], index: 7, kind: input, shape index: {}]
  %s8 = inlined_call_operand.vmem [shape: f32[1,4], index: 8, kind: input, shape index: {}]
  %s9 = inlined_call_operand.vmem [shape: f32[8,4], index: 9, kind: output, shape index: {}]
  %s10 = sld [smem:[#allocation0]]
  $region46: #{lstm_net_forward.1} parent=0
    _
  %s12 = ssub.s32 1, %s10
  %s13 = scalar_select 0, %s12, %s10
  // Predicated region
  $region2: #{lstm_net_forward.1} parent=0 // pred_check
    _
  $region3: #{lstm_net_forward.1} parent=0 // pred_check_branch
    %15 = sbr.rel (0) target = $region5
  $region4: #{lstm_net_forward.1} parent=0 // pred_region
    _
  $region5: #{lstm_net_forward.1} parent=0 // pred_fallthru
    _
  // Predicated region
  $region6: #{lstm_net_forward.1} parent=0 // pred_check
    _
  $region7: #{lstm_net_forward.1} parent=0 // pred_check_branch
    %17 = sbr.rel (0) target = $region9
  $region8: #{lstm_net_forward.1} parent=0 // pred_region
    _
  $region9: #{lstm_net_forward.1} parent=0 // pred_fallthru
    _
  // Predicated region
  $region10: #{lstm_net_forward.1} parent=0 // pred_check
    _
  $region11: #{lstm_net_forward.1} parent=0 // pred_check_branch
    %19 = sbr.rel (0) target = $region13
  $region12: #{lstm_net_forward.1} parent=0 // pred_region
    _
  $region13: #{lstm_net_forward.1} parent=0 // pred_fallthru
    _
  // Predicated region
  $region14: #{lstm_net_forward.1} parent=0 // pred_check
    _
  $region15: #{lstm_net_forward.1} parent=0 // pred_check_branch
    %21 = sbr.rel (0) target = $region17
  $region16: #{lstm_net_forward.1} parent=0 // pred_region
    _
  $region17: #{lstm_net_forward.1} parent=0 // pred_fallthru
    _
  // Predicated region
  $region18: #{lstm_net_forward.1} parent=0 // pred_check
    _
  $region19: #{lstm_net_forward.1} parent=0 // pred_check_branch
    %23 = sbr.rel (0) target = $region21
  $region20: #{lstm_net_forward.1} parent=0 // pred_region
    _
  $region21: #{lstm_net_forward.1} parent=0 // pred_fallthru
    _
  // Predicated region
  $region22: #{lstm_net_forward.1} parent=0 // pred_check
    _
  $region23: #{lstm_net_forward.1} parent=0 // pred_check_branch
    %25 = sbr.rel (0) target = $region25
  $region24: #{lstm_net_forward.1} parent=0 // pred_region
    _
  $region25: #{lstm_net_forward.1} parent=0 // pred_fallthru
    _
  // Predicated region
  $region26: #{lstm_net_forward.1} parent=0 // pred_check
    _
  $region27: #{lstm_net_forward.1} parent=0 // pred_check_branch
    %27 = sbr.rel (0) target = $region29
  $region28: #{lstm_net_forward.1} parent=0 // pred_region
    _
  $region29: #{lstm_net_forward.1} parent=0 // pred_fallthru
    _
  // Predicated region
  $region30: #{lstm_net_forward.1} parent=0 // pred_check
    _
  $region31: #{lstm_net_forward.1} parent=0 // pred_check_branch
    %29 = sbr.rel (0) target = $region33
  $region32: #{lstm_net_forward.1} parent=0 // pred_region
    _
  $region33: #{lstm_net_forward.1} parent=0 // pred_fallthru
    _
  // Predicated region
  $region34: #{lstm_net_forward.1} parent=0 // pred_check
    _
  $region35: #{lstm_net_forward.1} parent=0 // pred_check_branch
    %31 = sbr.rel (0) target = $region37
  $region36: #{lstm_net_forward.1} parent=0 // pred_region
    _
  $region37: #{lstm_net_forward.1} parent=0 // pred_fallthru
    _
  %v32 = vld [vmem:[%s0] sm:$0xff]
  %v33 = vld [vmem:[%s0 + $0x8] sm:$0xff]
  %v34 = vld [vmem:[%s0 + $0x10] sm:$0xff]
  %v35 = vld [vmem:[%s0 + $0x18] sm:$0xff]
  %v36 = vld [vmem:[%s0 + $0x20] sm:$0xff]
  %v37 = vld [vmem:[%s0 + $0x28] sm:$0xff]
  %v38 = vld [vmem:[%s0 + $0x30] sm:$0xff]
  %v39 = vld [vmem:[%s0 + $0x38] sm:$0xff]
  %v40 = vld [vmem:[%s1] sm:$0xff]
  %v41 = vld [vmem:[%s1 + $0x8] sm:$0xff]
  %v42 = vld [vmem:[%s3] sm:$0x1]
  %v44 = vlaneseq
  %v45 = vshrl.u32 %v44, 7
  %v46 = vsub.s32 0, %v45
  %v47 = vrot.slane %v42, %v46
  %vm49 = vcmask 130048
  %v51 = vsel %vm49, %v32, 0
  %v54 = vsel %vm49, %v33, 0
  %v57 = vsel %vm49, %v34, 0
  %v60 = vsel %vm49, %v35, 0
  %v63 = vsel %vm49, %v36, 0
  %v66 = vsel %vm49, %v37, 0
  %v69 = vsel %vm49, %v38, 0
  %v72 = vsel %vm49, %v39, 0
  %74 = vmatprep.subr.mxu0 0.0
  %75 = vmatpush1.msra.mxu0 %v40
  %76 = vmatprep.subr.mxu0 0.0
  %77 = vmatpush1.msra.mxu0 %v41
  %78 = vmatprep.subr.mxu0 0.0
  %79 = vmatpush1.msra.mxu0 0.0
  %80 = vmatprep.subr.mxu0 0.0
  %81 = vmatpush1.msra.mxu0 0.0
  %82 = vmatprep.subr.mxu0 0.0
  %83 = vmatpush1.msra.mxu0 0.0
  %84 = vmatprep.subr.mxu0 0.0
  %85 = vmatpush1.msra.mxu0 0.0
  %86 = vmatprep.subr.mxu0 0.0
  %87 = vmatpush1.msra.mxu0 0.0
  %88 = vmatprep.subr.mxu0 0.0
  %89 = vmatpush1.msra.mxu0 0.0
  %90 = vmatprep.subr.mxu0 0.0
  %91 = vmatpush1.msra.mxu0 0.0
  %92 = vmatprep.subr.mxu0 0.0
  %93 = vmatpush1.msra.mxu0 0.0
  %94 = vmatprep.subr.mxu0 0.0
  %95 = vmatpush1.msra.mxu0 0.0
  %96 = vmatprep.subr.mxu0 0.0
  %97 = vmatpush1.msra.mxu0 0.0
  %98 = vmatprep.subr.mxu0 0.0
  %99 = vmatpush1.msra.mxu0 0.0
  %100 = vmatprep.subr.mxu0 0.0
  %101 = vmatpush1.msra.mxu0 0.0
  %102 = vmatprep.subr.mxu0 0.0
  %103 = vmatpush1.msra.mxu0 0.0
  %104 = vmatprep.subr.mxu0 0.0
  %105 = vmatpush1.msra.mxu0 0.0
  %106 = vmatprep.subr.mxu0 0.0
  %107 = vmatpush1.msra.mxu0 0.0
  %108 = vmatprep.subr.mxu0 0.0
  %109 = vmatpush1.msra.mxu0 0.0
  %110 = vmatprep.subr.mxu0 0.0
  %111 = vmatpush1.msra.mxu0 0.0
  %112 = vmatprep.subr.mxu0 0.0
  %113 = vmatpush1.msra.mxu0 0.0
  %114 = vmatprep.subr.mxu0 0.0
  %115 = vmatpush1.msra.mxu0 0.0
  %116 = vmatprep.subr.mxu0 0.0
  %117 = vmatpush1.msra.mxu0 0.0
  %118 = vmatprep.subr.mxu0 0.0
  %119 = vmatpush1.msra.mxu0 0.0
  %120 = vmatprep.subr.mxu0 0.0
  %121 = vmatpush1.msra.mxu0 0.0
  %122 = vmatprep.subr.mxu0 0.0
  %123 = vmatpush1.msra.mxu0 0.0
  %124 = vmatprep.subr.mxu0 0.0
  %125 = vmatpush1.msra.mxu0 0.0
  %126 = vmatprep.subr.mxu0 0.0
  %127 = vmatpush1.msra.mxu0 0.0
  %128 = vmatprep.subr.mxu0 0.0
  %129 = vmatpush1.msra.mxu0 0.0
  %130 = vmatprep.subr.mxu0 0.0
  %131 = vmatpush1.msra.mxu0 0.0
  %132 = vmatprep.subr.mxu0 0.0
  %133 = vmatpush1.msra.mxu0 0.0
  %134 = vmatprep.subr.mxu0 0.0
  %135 = vmatpush1.msra.mxu0 0.0
  %136 = vmatprep.subr.mxu0 0.0
  %137 = vmatpush1.msra.mxu0 0.0
  %138 = vmatprep.mubr.f32.mxu0 0.0
  %139 = vmatmul.mubr.f32.gmra.mrb[0].mxu0 %v51
  %v140 = vpop.f32.mrb[0].mxu0
  %v141 = vadd.f32 %v47, %v140
  %v142 = vpop.f32.mrb[0].mxu0
  %143 = vmatprep.mubr.f32.mxu0 0.0
  %144 = vmatmul.mubr.f32.gmra.mrb[0].mxu0 %v54
  %v145 = vpop.f32.mrb[0].mxu0
  %v146 = vadd.f32 %v47, %v145
  %v147 = vpop.f32.mrb[0].mxu0
  %148 = vmatprep.mubr.f32.mxu0 0.0
  %149 = vmatmul.mubr.f32.gmra.mrb[0].mxu0 %v57
  %v150 = vpop.f32.mrb[0].mxu0
  %v151 = vadd.f32 %v47, %v150
  %v152 = vpop.f32.mrb[0].mxu0
  %153 = vmatprep.mubr.f32.mxu0 0.0
  %154 = vmatmul.mubr.f32.gmra.mrb[0].mxu0 %v60
  %v155 = vpop.f32.mrb[0].mxu0
  %v156 = vadd.f32 %v47, %v155
  %v157 = vpop.f32.mrb[0].mxu0
  %158 = vmatprep.mubr.f32.mxu0 0.0
  %159 = vmatmul.mubr.f32.gmra.mrb[0].mxu0 %v63
  %v160 = vpop.f32.mrb[0].mxu0
  %v161 = vadd.f32 %v47, %v160
  %v162 = vpop.f32.mrb[0].mxu0
  %163 = vmatprep.mubr.f32.mxu0 0.0
  %164 = vmatmul.mubr.f32.gmra.mrb[0].mxu0 %v66
  %v165 = vpop.f32.mrb[0].mxu0
  %v166 = vadd.f32 %v47, %v165
  %v167 = vpop.f32.mrb[0].mxu0
  %168 = vmatprep.mubr.f32.mxu0 0.0
  %169 = vmatmul.mubr.f32.gmra.mrb[0].mxu0 %v69
  %v170 = vpop.f32.mrb[0].mxu0
  %v171 = vadd.f32 %v47, %v170
  %v172 = vpop.f32.mrb[0].mxu0
  %173 = vmatprep.mubr.f32.mxu0 0.0
  %174 = vmatmul.mubr.f32.gmra.mrb[0].mxu0 %v72
  %v175 = vpop.f32.mrb[0].mxu0
  %v176 = vadd.f32 %v47, %v175
  %v177 = vpop.f32.mrb[0].mxu0
  %178 = vdwg.mxu0
  %179 = vst [vmem:[#allocation2] sm:$0xff] %v141
  %180 = vst [vmem:[#allocation2 + $0x8] sm:$0xff] %v146
  %181 = vst [vmem:[#allocation2 + $0x10] sm:$0xff] %v151
  %182 = vst [vmem:[#allocation2 + $0x18] sm:$0xff] %v156
  %183 = vst [vmem:[#allocation2 + $0x20] sm:$0xff] %v161
  %184 = vst [vmem:[#allocation2 + $0x28] sm:$0xff] %v166
  %185 = vst [vmem:[#allocation2 + $0x30] sm:$0xff] %v171
  %186 = vst [vmem:[#allocation2 + $0x38] sm:$0xff] %v176
  %v187 = vld [vmem:[%s2] sm:$0xff]
  %v188 = vld [vmem:[%s2 + $0x8] sm:$0xff]
  %v189 = vld [vmem:[%s2 + $0x10] sm:$0xff]
  %v190 = vld [vmem:[%s2 + $0x18] sm:$0xff]
  %v191 = vld [vmem:[#allocation2] sm:$0xff]
  %vm192 = vcmask 261120
  %v194 = vsel %vm192, 0.0, 0
  %196 = vmatprep.subr.mxu0 0.0
  %197 = vmatpush1.msra.mxu0 %v187
  %198 = vmatprep.subr.mxu0 0.0
  %199 = vmatpush1.msra.mxu0 %v188
  %200 = vmatprep.subr.mxu0 0.0
  %201 = vmatpush1.msra.mxu0 %v189
  %202 = vmatprep.subr.mxu0 0.0
  %203 = vmatpush1.msra.mxu0 %v190
  %204 = vmatprep.subr.mxu0 0.0
  %205 = vmatpush1.msra.mxu0 0.0
  %206 = vmatprep.subr.mxu0 0.0
  %207 = vmatpush1.msra.mxu0 0.0
  %208 = vmatprep.subr.mxu0 0.0
  %209 = vmatpush1.msra.mxu0 0.0
  %210 = vmatprep.subr.mxu0 0.0
  %211 = vmatpush1.msra.mxu0 0.0
  %212 = vmatprep.subr.mxu0 0.0
  %213 = vmatpush1.msra.mxu0 0.0
  %214 = vmatprep.subr.mxu0 0.0
  %215 = vmatpush1.msra.mxu0 0.0
  %216 = vmatprep.subr.mxu0 0.0
  %217 = vmatpush1.msra.mxu0 0.0
  %218 = vmatprep.subr.mxu0 0.0
  %219 = vmatpush1.msra.mxu0 0.0
  %220 = vmatprep.subr.mxu0 0.0
  %221 = vmatpush1.msra.mxu0 0.0
  %222 = vmatprep.subr.mxu0 0.0
  %223 = vmatpush1.msra.mxu0 0.0
  %224 = vmatprep.subr.mxu0 0.0
  %225 = vmatpush1.msra.mxu0 0.0
  %226 = vmatprep.subr.mxu0 0.0
  %227 = vmatpush1.msra.mxu0 0.0
  %228 = vmatprep.subr.mxu0 0.0
  %229 = vmatpush1.msra.mxu0 0.0
  %230 = vmatprep.subr.mxu0 0.0
  %231 = vmatpush1.msra.mxu0 0.0
  %232 = vmatprep.subr.mxu0 0.0
  %233 = vmatpush1.msra.mxu0 0.0
  %234 = vmatprep.subr.mxu0 0.0
  %235 = vmatpush1.msra.mxu0 0.0
  %236 = vmatprep.subr.mxu0 0.0
  %237 = vmatpush1.msra.mxu0 0.0
  %238 = vmatprep.subr.mxu0 0.0
  %239 = vmatpush1.msra.mxu0 0.0
  %240 = vmatprep.subr.mxu0 0.0
  %241 = vmatpush1.msra.mxu0 0.0
  %242 = vmatprep.subr.mxu0 0.0
  %243 = vmatpush1.msra.mxu0 0.0
  %244 = vmatprep.subr.mxu0 0.0
  %245 = vmatpush1.msra.mxu0 0.0
  %246 = vmatprep.subr.mxu0 0.0
  %247 = vmatpush1.msra.mxu0 0.0
  %248 = vmatprep.subr.mxu0 0.0
  %249 = vmatpush1.msra.mxu0 0.0
  %250 = vmatprep.subr.mxu0 0.0
  %251 = vmatpush1.msra.mxu0 0.0
  %252 = vmatprep.subr.mxu0 0.0
  %253 = vmatpush1.msra.mxu0 0.0
  %254 = vmatprep.subr.mxu0 0.0
  %255 = vmatpush1.msra.mxu0 0.0
  %256 = vmatprep.subr.mxu0 0.0
  %257 = vmatpush1.msra.mxu0 0.0
  %258 = vmatprep.subr.mxu0 0.0
  %259 = vmatpush1.msra.mxu0 0.0
  %260 = vmatprep.mubr.f32.mxu0 0.0
  %261 = vmatmul.mubr.f32.gmra.mrb[0].mxu0 %v194
  %v262 = vpop.f32.mrb[0].mxu0
  %v263 = vadd.f32 0.0, %v262
  %v264 = vpop.f32.mrb[0].mxu0
  %265 = vdwg.mxu0
  %v266 = vadd.f32 %v191, %v263
  %v267 = vxor.u32 %v266, 2147483648
  %v268 = vmul.f32 %v267, 1.442695
  %v269 = vpow.pop %v268
  %v270 = vadd.f32 %v269, 1.0
  %v271 = vrcp.pop %v270
  %v272 = vmul.f32 1.0, %v271
  %v273 = vtanh.pop %v266
  %v274 = vmul.f32 %v272, 0.0
  %276 = vrot.lane.b32.xlu0 %v273, 64
  %v277 = vpop.permute.xlu0 %276
  %v279 = vmul.f32 %v272, %v277
  %281 = vrot.lane.b32.xlu0 %v279, 32
  %v282 = vpop.permute.xlu0 %281
  %v284 = vadd.f32 %v274, %v282
  %v285 = vtanh.pop %v284
  %287 = vrot.lane.b32.xlu0 %v285, 64
  %v288 = vpop.permute.xlu0 %287
  %v290 = vmul.f32 %v272, %v288
  %292 = vrot.lane.b32.xlu0 %v290, 32
  %v293 = vpop.permute.xlu0 %292
  %295 = vst.msk [vmem:[#allocation3] sm:$0xff] %vm192, %v293
  %s296 = scalar_lea.vmem [#allocation2], 8
  %v297 = vld [vmem:[%s296] sm:$0xff]
  %v298 = vsel %vm192, %v293, 0
  %300 = vmatprep.subr.mxu0 0.0
  %301 = vmatpush1.msra.mxu0 %v187
  %302 = vmatprep.subr.mxu0 0.0
  %303 = vmatpush1.msra.mxu0 %v188
  %304 = vmatprep.subr.mxu0 0.0
  %305 = vmatpush1.msra.mxu0 %v189
  %306 = vmatprep.subr.mxu0 0.0
  %307 = vmatpush1.msra.mxu0 %v190
  %308 = vmatprep.subr.mxu0 0.0
  %309 = vmatpush1.msra.mxu0 0.0
  %310 = vmatprep.subr.mxu0 0.0
  %311 = vmatpush1.msra.mxu0 0.0
  %312 = vmatprep.subr.mxu0 0.0
  %313 = vmatpush1.msra.mxu0 0.0
  %314 = vmatprep.subr.mxu0 0.0
  %315 = vmatpush1.msra.mxu0 0.0
  %316 = vmatprep.subr.mxu0 0.0
  %317 = vmatpush1.msra.mxu0 0.0
  %318 = vmatprep.subr.mxu0 0.0
  %319 = vmatpush1.msra.mxu0 0.0
  %320 = vmatprep.subr.mxu0 0.0
  %321 = vmatpush1.msra.mxu0 0.0
  %322 = vmatprep.subr.mxu0 0.0
  %323 = vmatpush1.msra.mxu0 0.0
  %324 = vmatprep.subr.mxu0 0.0
  %325 = vmatpush1.msra.mxu0 0.0
  %326 = vmatprep.subr.mxu0 0.0
  %327 = vmatpush1.msra.mxu0 0.0
  %328 = vmatprep.subr.mxu0 0.0
  %329 = vmatpush1.msra.mxu0 0.0
  %330 = vmatprep.subr.mxu0 0.0
  %331 = vmatpush1.msra.mxu0 0.0
  %332 = vmatprep.subr.mxu0 0.0
  %333 = vmatpush1.msra.mxu0 0.0
  %334 = vmatprep.subr.mxu0 0.0
  %335 = vmatpush1.msra.mxu0 0.0
  %336 = vmatprep.subr.mxu0 0.0
  %337 = vmatpush1.msra.mxu0 0.0
  %338 = vmatprep.subr.mxu0 0.0
  %339 = vmatpush1.msra.mxu0 0.0
  %340 = vmatprep.subr.mxu0 0.0
  %341 = vmatpush1.msra.mxu0 0.0
  %342 = vmatprep.subr.mxu0 0.0
  %343 = vmatpush1.msra.mxu0 0.0
  %344 = vmatprep.subr.mxu0 0.0
  %345 = vmatpush1.msra.mxu0 0.0
  %346 = vmatprep.subr.mxu0 0.0
  %347 = vmatpush1.msra.mxu0 0.0
  %348 = vmatprep.subr.mxu0 0.0
  %349 = vmatpush1.msra.mxu0 0.0
  %350 = vmatprep.subr.mxu0 0.0
  %351 = vmatpush1.msra.mxu0 0.0
  %352 = vmatprep.subr.mxu0 0.0
  %353 = vmatpush1.msra.mxu0 0.0
  %354 = vmatprep.subr.mxu0 0.0
  %355 = vmatpush1.msra.mxu0 0.0
  %356 = vmatprep.subr.mxu0 0.0
  %357 = vmatpush1.msra.mxu0 0.0
  %358 = vmatprep.subr.mxu0 0.0
  %359 = vmatpush1.msra.mxu0 0.0
  %360 = vmatprep.subr.mxu0 0.0
  %361 = vmatpush1.msra.mxu0 0.0
  %362 = vmatprep.subr.mxu0 0.0
  %363 = vmatpush1.msra.mxu0 0.0
  %364 = vmatprep.mubr.f32.mxu0 0.0
  %365 = vmatmul.mubr.f32.gmra.mrb[0].mxu0 %v298
  %v366 = vpop.f32.mrb[0].mxu0
  %v367 = vadd.f32 0.0, %v366
  %v368 = vpop.f32.mrb[0].mxu0
  %369 = vdwg.mxu0
  %v370 = vadd.f32 %v297, %v367
  %v371 = vxor.u32 %v370, 2147483648
  %v372 = vmul.f32 %v371, 1.442695
  %v373 = vpow.pop %v372
  %v374 = vadd.f32 %v373, 1.0
  %v375 = vrcp.pop %v374
  %v376 = vmul.f32 1.0, %v375
  %v377 = vtanh.pop %v370
  %v378 = vmul.f32 %v376, %v284
  %380 = vrot.lane.b32.xlu0 %v377, 64
  %v381 = vpop.permute.xlu0 %380
  %v383 = vmul.f32 %v376, %v381
  %385 = vrot.lane.b32.xlu0 %v383, 32
  %v386 = vpop.permute.xlu0 %385
  %v388 = vadd.f32 %v378, %v386
  %v389 = vtanh.pop %v388
  %391 = vrot.lane.b32.xlu0 %v389, 64
  %v392 = vpop.permute.xlu0 %391
  %v394 = vmul.f32 %v376, %v392
  %396 = vrot.lane.b32.xlu0 %v394, 32
  %v397 = vpop.permute.xlu0 %396
  %s399 = scalar_lea.vmem [#allocation3], 8
  %400 = vst.msk [vmem:[%s399] sm:$0xff] %vm192, %v397
  %s401 = scalar_lea.vmem [#allocation2], 16
  %v402 = vld [vmem:[%s401] sm:$0xff]
  %v403 = vsel %vm192, %v397, 0
  %405 = vmatprep.subr.mxu0 0.0
  %406 = vmatpush1.msra.mxu0 %v187
  %407 = vmatprep.subr.mxu0 0.0
  %408 = vmatpush1.msra.mxu0 %v188
  %409 = vmatprep.subr.mxu0 0.0
  %410 = vmatpush1.msra.mxu0 %v189
  %411 = vmatprep.subr.mxu0 0.0
  %412 = vmatpush1.msra.mxu0 %v190
  %413 = vmatprep.subr.mxu0 0.0
  %414 = vmatpush1.msra.mxu0 0.0
  %415 = vmatprep.subr.mxu0 0.0
  %416 = vmatpush1.msra.mxu0 0.0
  %417 = vmatprep.subr.mxu0 0.0
  %418 = vmatpush1.msra.mxu0 0.0
  %419 = vmatprep.subr.mxu0 0.0
  %420 = vmatpush1.msra.mxu0 0.0
  %421 = vmatprep.subr.mxu0 0.0
  %422 = vmatpush1.msra.mxu0 0.0
  %423 = vmatprep.subr.mxu0 0.0
  %424 = vmatpush1.msra.mxu0 0.0
  %425 = vmatprep.subr.mxu0 0.0
  %426 = vmatpush1.msra.mxu0 0.0
  %427 = vmatprep.subr.mxu0 0.0
  %428 = vmatpush1.msra.mxu0 0.0
  %429 = vmatprep.subr.mxu0 0.0
  %430 = vmatpush1.msra.mxu0 0.0
  %431 = vmatprep.subr.mxu0 0.0
  %432 = vmatpush1.msra.mxu0 0.0
  %433 = vmatprep.subr.mxu0 0.0
  %434 = vmatpush1.msra.mxu0 0.0
  %435 = vmatprep.subr.mxu0 0.0
  %436 = vmatpush1.msra.mxu0 0.0
  %437 = vmatprep.subr.mxu0 0.0
  %438 = vmatpush1.msra.mxu0 0.0
  %439 = vmatprep.subr.mxu0 0.0
  %440 = vmatpush1.msra.mxu0 0.0
  %441 = vmatprep.subr.mxu0 0.0
  %442 = vmatpush1.msra.mxu0 0.0
  %443 = vmatprep.subr.mxu0 0.0
  %444 = vmatpush1.msra.mxu0 0.0
  %445 = vmatprep.subr.mxu0 0.0
  %446 = vmatpush1.msra.mxu0 0.0
  %447 = vmatprep.subr.mxu0 0.0
  %448 = vmatpush1.msra.mxu0 0.0
  %449 = vmatprep.subr.mxu0 0.0
  %450 = vmatpush1.msra.mxu0 0.0
  %451 = vmatprep.subr.mxu0 0.0
  %452 = vmatpush1.msra.mxu0 0.0
  %453 = vmatprep.subr.mxu0 0.0
  %454 = vmatpush1.msra.mxu0 0.0
  %455 = vmatprep.subr.mxu0 0.0
  %456 = vmatpush1.msra.mxu0 0.0
  %457 = vmatprep.subr.mxu0 0.0
  %458 = vmatpush1.msra.mxu0 0.0
  %459 = vmatprep.subr.mxu0 0.0
  %460 = vmatpush1.msra.mxu0 0.0
  %461 = vmatprep.subr.mxu0 0.0
  %462 = vmatpush1.msra.mxu0 0.0
  %463 = vmatprep.subr.mxu0 0.0
  %464 = vmatpush1.msra.mxu0 0.0
  %465 = vmatprep.subr.mxu0 0.0
  %466 = vmatpush1.msra.mxu0 0.0
  %467 = vmatprep.subr.mxu0 0.0
  %468 = vmatpush1.msra.mxu0 0.0
  %469 = vmatprep.mubr.f32.mxu0 0.0
  %470 = vmatmul.mubr.f32.gmra.mrb[0].mxu0 %v403
  %v471 = vpop.f32.mrb[0].mxu0
  %v472 = vadd.f32 0.0, %v471
  %v473 = vpop.f32.mrb[0].mxu0
  %474 = vdwg.mxu0
  %v475 = vadd.f32 %v402, %v472
  %v476 = vxor.u32 %v475, 2147483648
  %v477 = vmul.f32 %v476, 1.442695
  %v478 = vpow.pop %v477
  %v479 = vadd.f32 %v478, 1.0
  %v480 = vrcp.pop %v479
  %v481 = vmul.f32 1.0, %v480
  %v482 = vtanh.pop %v475
  %v483 = vmul.f32 %v481, %v388
  %485 = vrot.lane.b32.xlu0 %v482, 64
  %v486 = vpop.permute.xlu0 %485
  %v488 = vmul.f32 %v481, %v486
  %490 = vrot.lane.b32.xlu0 %v488, 32
  %v491 = vpop.permute.xlu0 %490
  %v493 = vadd.f32 %v483, %v491
  %v494 = vtanh.pop %v493
  %496 = vrot.lane.b32.xlu0 %v494, 64
  %v497 = vpop.permute.xlu0 %496
  %v499 = vmul.f32 %v481, %v497
  %501 = vrot.lane.b32.xlu0 %v499, 32
  %v502 = vpop.permute.xlu0 %501
  %s504 = scalar_lea.vmem [#allocation3], 16
  %505 = vst.msk [vmem:[%s504] sm:$0xff] %vm192, %v502
  %s506 = scalar_lea.vmem [#allocation2], 24
  %v507 = vld [vmem:[%s506] sm:$0xff]
  %v508 = vsel %vm192, %v502, 0
  %510 = vmatprep.subr.mxu0 0.0
  %511 = vmatpush1.msra.mxu0 %v187
  %512 = vmatprep.subr.mxu0 0.0
  %513 = vmatpush1.msra.mxu0 %v188
  %514 = vmatprep.subr.mxu0 0.0
  %515 = vmatpush1.msra.mxu0 %v189
  %516 = vmatprep.subr.mxu0 0.0
  %517 = vmatpush1.msra.mxu0 %v190
  %518 = vmatprep.subr.mxu0 0.0
  %519 = vmatpush1.msra.mxu0 0.0
  %520 = vmatprep.subr.mxu0 0.0
  %521 = vmatpush1.msra.mxu0 0.0
  %522 = vmatprep.subr.mxu0 0.0
  %523 = vmatpush1.msra.mxu0 0.0
  %524 = vmatprep.subr.mxu0 0.0
  %525 = vmatpush1.msra.mxu0 0.0
  %526 = vmatprep.subr.mxu0 0.0
  %527 = vmatpush1.msra.mxu0 0.0
  %528 = vmatprep.subr.mxu0 0.0
  %529 = vmatpush1.msra.mxu0 0.0
  %530 = vmatprep.subr.mxu0 0.0
  %531 = vmatpush1.msra.mxu0 0.0
  %532 = vmatprep.subr.mxu0 0.0
  %533 = vmatpush1.msra.mxu0 0.0
  %534 = vmatprep.subr.mxu0 0.0
  %535 = vmatpush1.msra.mxu0 0.0
  %536 = vmatprep.subr.mxu0 0.0
  %537 = vmatpush1.msra.mxu0 0.0
  %538 = vmatprep.subr.mxu0 0.0
  %539 = vmatpush1.msra.mxu0 0.0
  %540 = vmatprep.subr.mxu0 0.0
  %541 = vmatpush1.msra.mxu0 0.0
  %542 = vmatprep.subr.mxu0 0.0
  %543 = vmatpush1.msra.mxu0 0.0
  %544 = vmatprep.subr.mxu0 0.0
  %545 = vmatpush1.msra.mxu0 0.0
  %546 = vmatprep.subr.mxu0 0.0
  %547 = vmatpush1.msra.mxu0 0.0
  %548 = vmatprep.subr.mxu0 0.0
  %549 = vmatpush1.msra.mxu0 0.0
  %550 = vmatprep.subr.mxu0 0.0
  %551 = vmatpush1.msra.mxu0 0.0
  %552 = vmatprep.subr.mxu0 0.0
  %553 = vmatpush1.msra.mxu0 0.0
  %554 = vmatprep.subr.mxu0 0.0
  %555 = vmatpush1.msra.mxu0 0.0
  %556 = vmatprep.subr.mxu0 0.0
  %557 = vmatpush1.msra.mxu0 0.0
  %558 = vmatprep.subr.mxu0 0.0
  %559 = vmatpush1.msra.mxu0 0.0
  %560 = vmatprep.subr.mxu0 0.0
  %561 = vmatpush1.msra.mxu0 0.0
  %562 = vmatprep.subr.mxu0 0.0
  %563 = vmatpush1.msra.mxu0 0.0
  %564 = vmatprep.subr.mxu0 0.0
  %565 = vmatpush1.msra.mxu0 0.0
  %566 = vmatprep.subr.mxu0 0.0
  %567 = vmatpush1.msra.mxu0 0.0
  %568 = vmatprep.subr.mxu0 0.0
  %569 = vmatpush1.msra.mxu0 0.0
  %570 = vmatprep.subr.mxu0 0.0
  %571 = vmatpush1.msra.mxu0 0.0
  %572 = vmatprep.subr.mxu0 0.0
  %573 = vmatpush1.msra.mxu0 0.0
  %574 = vmatprep.mubr.f32.mxu0 0.0
  %575 = vmatmul.mubr.f32.gmra.mrb[0].mxu0 %v508
  %v576 = vpop.f32.mrb[0].mxu0
  %v577 = vadd.f32 0.0, %v576
  %v578 = vpop.f32.mrb[0].mxu0
  %579 = vdwg.mxu0
  %v580 = vadd.f32 %v507, %v577
  %v581 = vxor.u32 %v580, 2147483648
  %v582 = vmul.f32 %v581, 1.442695
  %v583 = vpow.pop %v582
  %v584 = vadd.f32 %v583, 1.0
  %v585 = vrcp.pop %v584
  %v586 = vmul.f32 1.0, %v585
  %v587 = vtanh.pop %v580
  %v588 = vmul.f32 %v586, %v493
  %590 = vrot.lane.b32.xlu0 %v587, 64
  %v591 = vpop.permute.xlu0 %590
  %v593 = vmul.f32 %v586, %v591
  %595 = vrot.lane.b32.xlu0 %v593, 32
  %v596 = vpop.permute.xlu0 %595
  %v598 = vadd.f32 %v588, %v596
  %v599 = vtanh.pop %v598
  %601 = vrot.lane.b32.xlu0 %v599, 64
  %v602 = vpop.permute.xlu0 %601
  %v604 = vmul.f32 %v586, %v602
  %606 = vrot.lane.b32.xlu0 %v604, 32
  %v607 = vpop.permute.xlu0 %606
  %s609 = scalar_lea.vmem [#allocation3], 24
  %610 = vst.msk [vmem:[%s609] sm:$0xff] %vm192, %v607
  %s611 = scalar_lea.vmem [#allocation2], 32
  %v612 = vld [vmem:[%s611] sm:$0xff]
  %v613 = vsel %vm192, %v607, 0
  %615 = vmatprep.subr.mxu0 0.0
  %616 = vmatpush1.msra.mxu0 %v187
  %617 = vmatprep.subr.mxu0 0.0
  %618 = vmatpush1.msra.mxu0 %v188
  %619 = vmatprep.subr.mxu0 0.0
  %620 = vmatpush1.msra.mxu0 %v189
  %621 = vmatprep.subr.mxu0 0.0
  %622 = vmatpush1.msra.mxu0 %v190
  %623 = vmatprep.subr.mxu0 0.0
  %624 = vmatpush1.msra.mxu0 0.0
  %625 = vmatprep.subr.mxu0 0.0
  %626 = vmatpush1.msra.mxu0 0.0
  %627 = vmatprep.subr.mxu0 0.0
  %628 = vmatpush1.msra.mxu0 0.0
  %629 = vmatprep.subr.mxu0 0.0
  %630 = vmatpush1.msra.mxu0 0.0
  %631 = vmatprep.subr.mxu0 0.0
  %632 = vmatpush1.msra.mxu0 0.0
  %633 = vmatprep.subr.mxu0 0.0
  %634 = vmatpush1.msra.mxu0 0.0
  %635 = vmatprep.subr.mxu0 0.0
  %636 = vmatpush1.msra.mxu0 0.0
  %637 = vmatprep.subr.mxu0 0.0
  %638 = vmatpush1.msra.mxu0 0.0
  %639 = vmatprep.subr.mxu0 0.0
  %640 = vmatpush1.msra.mxu0 0.0
  %641 = vmatprep.subr.mxu0 0.0
  %642 = vmatpush1.msra.mxu0 0.0
  %643 = vmatprep.subr.mxu0 0.0
  %644 = vmatpush1.msra.mxu0 0.0
  %645 = vmatprep.subr.mxu0 0.0
  %646 = vmatpush1.msra.mxu0 0.0
  %647 = vmatprep.subr.mxu0 0.0
  %648 = vmatpush1.msra.mxu0 0.0
  %649 = vmatprep.subr.mxu0 0.0
  %650 = vmatpush1.msra.mxu0 0.0
  %651 = vmatprep.subr.mxu0 0.0
  %652 = vmatpush1.msra.mxu0 0.0
  %653 = vmatprep.subr.mxu0 0.0
  %654 = vmatpush1.msra.mxu0 0.0
  %655 = vmatprep.subr.mxu0 0.0
  %656 = vmatpush1.msra.mxu0 0.0
  %657 = vmatprep.subr.mxu0 0.0
  %658 = vmatpush1.msra.mxu0 0.0
  %659 = vmatprep.subr.mxu0 0.0
  %660 = vmatpush1.msra.mxu0 0.0
  %661 = vmatprep.subr.mxu0 0.0
  %662 = vmatpush1.msra.mxu0 0.0
  %663 = vmatprep.subr.mxu0 0.0
  %664 = vmatpush1.msra.mxu0 0.0
  %665 = vmatprep.subr.mxu0 0.0
  %666 = vmatpush1.msra.mxu0 0.0
  %667 = vmatprep.subr.mxu0 0.0
  %668 = vmatpush1.msra.mxu0 0.0
  %669 = vmatprep.subr.mxu0 0.0
  %670 = vmatpush1.msra.mxu0 0.0
  %671 = vmatprep.subr.mxu0 0.0
  %672 = vmatpush1.msra.mxu0 0.0
  %673 = vmatprep.subr.mxu0 0.0
  %674 = vmatpush1.msra.mxu0 0.0
  %675 = vmatprep.subr.mxu0 0.0
  %676 = vmatpush1.msra.mxu0 0.0
  %677 = vmatprep.subr.mxu0 0.0
  %678 = vmatpush1.msra.mxu0 0.0
  %679 = vmatprep.mubr.f32.mxu0 0.0
  %680 = vmatmul.mubr.f32.gmra.mrb[0].mxu0 %v613
  %v681 = vpop.f32.mrb[0].mxu0
  %v682 = vadd.f32 0.0, %v681
  %v683 = vpop.f32.mrb[0].mxu0
  %684 = vdwg.mxu0
  %v685 = vadd.f32 %v612, %v682
  %v686 = vxor.u32 %v685, 2147483648
  %v687 = vmul.f32 %v686, 1.442695
  %v688 = vpow.pop %v687
  %v689 = vadd.f32 %v688, 1.0
  %v690 = vrcp.pop %v689
  %v691 = vmul.f32 1.0, %v690
  %v692 = vtanh.pop %v685
  %v693 = vmul.f32 %v691, %v598
  %695 = vrot.lane.b32.xlu0 %v692, 64
  %v696 = vpop.permute.xlu0 %695
  %v698 = vmul.f32 %v691, %v696
  %700 = vrot.lane.b32.xlu0 %v698, 32
  %v701 = vpop.permute.xlu0 %700
  %v703 = vadd.f32 %v693, %v701
  %v704 = vtanh.pop %v703
  %706 = vrot.lane.b32.xlu0 %v704, 64
  %v707 = vpop.permute.xlu0 %706
  %v709 = vmul.f32 %v691, %v707
  %711 = vrot.lane.b32.xlu0 %v709, 32
  %v712 = vpop.permute.xlu0 %711
  %s714 = scalar_lea.vmem [#allocation3], 32
  %715 = vst.msk [vmem:[%s714] sm:$0xff] %vm192, %v712
  %s716 = scalar_lea.vmem [#allocation2], 40
  %v717 = vld [vmem:[%s716] sm:$0xff]
  %v718 = vsel %vm192, %v712, 0
  %720 = vmatprep.subr.mxu0 0.0
  %721 = vmatpush1.msra.mxu0 %v187
  %722 = vmatprep.subr.mxu0 0.0
  %723 = vmatpush1.msra.mxu0 %v188
  %724 = vmatprep.subr.mxu0 0.0
  %725 = vmatpush1.msra.mxu0 %v189
  %726 = vmatprep.subr.mxu0 0.0
  %727 = vmatpush1.msra.mxu0 %v190
  %728 = vmatprep.subr.mxu0 0.0
  %729 = vmatpush1.msra.mxu0 0.0
  %730 = vmatprep.subr.mxu0 0.0
  %731 = vmatpush1.msra.mxu0 0.0
  %732 = vmatprep.subr.mxu0 0.0
  %733 = vmatpush1.msra.mxu0 0.0
  %734 = vmatprep.subr.mxu0 0.0
  %735 = vmatpush1.msra.mxu0 0.0
  %736 = vmatprep.subr.mxu0 0.0
  %737 = vmatpush1.msra.mxu0 0.0
  %738 = vmatprep.subr.mxu0 0.0
  %739 = vmatpush1.msra.mxu0 0.0
  %740 = vmatprep.subr.mxu0 0.0
  %741 = vmatpush1.msra.mxu0 0.0
  %742 = vmatprep.subr.mxu0 0.0
  %743 = vmatpush1.msra.mxu0 0.0
  %744 = vmatprep.subr.mxu0 0.0
  %745 = vmatpush1.msra.mxu0 0.0
  %746 = vmatprep.subr.mxu0 0.0
  %747 = vmatpush1.msra.mxu0 0.0
  %748 = vmatprep.subr.mxu0 0.0
  %749 = vmatpush1.msra.mxu0 0.0
  %750 = vmatprep.subr.mxu0 0.0
  %751 = vmatpush1.msra.mxu0 0.0
  %752 = vmatprep.subr.mxu0 0.0
  %753 = vmatpush1.msra.mxu0 0.0
  %754 = vmatprep.subr.mxu0 0.0
  %755 = vmatpush1.msra.mxu0 0.0
  %756 = vmatprep.subr.mxu0 0.0
  %757 = vmatpush1.msra.mxu0 0.0
  %758 = vmatprep.subr.mxu0 0.0
  %759 = vmatpush1.msra.mxu0 0.0
  %760 = vmatprep.subr.mxu0 0.0
  %761 = vmatpush1.msra.mxu0 0.0
  %762 = vmatprep.subr.mxu0 0.0
  %763 = vmatpush1.msra.mxu0 0.0
  %764 = vmatprep.subr.mxu0 0.0
  %765 = vmatpush1.msra.mxu0 0.0
  %766 = vmatprep.subr.mxu0 0.0
  %767 = vmatpush1.msra.mxu0 0.0
  %768 = vmatprep.subr.mxu0 0.0
  %769 = vmatpush1.msra.mxu0 0.0
  %770 = vmatprep.subr.mxu0 0.0
  %771 = vmatpush1.msra.mxu0 0.0
  %772 = vmatprep.subr.mxu0 0.0
  %773 = vmatpush1.msra.mxu0 0.0
  %774 = vmatprep.subr.mxu0 0.0
  %775 = vmatpush1.msra.mxu0 0.0
  %776 = vmatprep.subr.mxu0 0.0
  %777 = vmatpush1.msra.mxu0 0.0
  %778 = vmatprep.subr.mxu0 0.0
  %779 = vmatpush1.msra.mxu0 0.0
  %780 = vmatprep.subr.mxu0 0.0
  %781 = vmatpush1.msra.mxu0 0.0
  %782 = vmatprep.subr.mxu0 0.0
  %783 = vmatpush1.msra.mxu0 0.0
  %784 = vmatprep.mubr.f32.mxu0 0.0
  %785 = vmatmul.mubr.f32.gmra.mrb[0].mxu0 %v718
  %v786 = vpop.f32.mrb[0].mxu0
  %v787 = vadd.f32 0.0, %v786
  %v788 = vpop.f32.mrb[0].mxu0
  %789 = vdwg.mxu0
  %v790 = vadd.f32 %v717, %v787
  %v791 = vxor.u32 %v790, 2147483648
  %v792 = vmul.f32 %v791, 1.442695
  %v793 = vpow.pop %v792
  %v794 = vadd.f32 %v793, 1.0
  %v795 = vrcp.pop %v794
  %v796 = vmul.f32 1.0, %v795
  %v797 = vtanh.pop %v790
  %v798 = vmul.f32 %v796, %v703
  %800 = vrot.lane.b32.xlu0 %v797, 64
  %v801 = vpop.permute.xlu0 %800
  %v803 = vmul.f32 %v796, %v801
  %805 = vrot.lane.b32.xlu0 %v803, 32
  %v806 = vpop.permute.xlu0 %805
  %v808 = vadd.f32 %v798, %v806
  %v809 = vtanh.pop %v808
  %811 = vrot.lane.b32.xlu0 %v809, 64
  %v812 = vpop.permute.xlu0 %811
  %v814 = vmul.f32 %v796, %v812
  %816 = vrot.lane.b32.xlu0 %v814, 32
  %v817 = vpop.permute.xlu0 %816
  %s819 = scalar_lea.vmem [#allocation3], 40
  %820 = vst.msk [vmem:[%s819] sm:$0xff] %vm192, %v817
  %s821 = scalar_lea.vmem [#allocation2], 48
  %v822 = vld [vmem:[%s821] sm:$0xff]
  %v823 = vsel %vm192, %v817, 0
  %825 = vmatprep.subr.mxu0 0.0
  %826 = vmatpush1.msra.mxu0 %v187
  %827 = vmatprep.subr.mxu0 0.0
  %828 = vmatpush1.msra.mxu0 %v188
  %829 = vmatprep.subr.mxu0 0.0
  %830 = vmatpush1.msra.mxu0 %v189
  %831 = vmatprep.subr.mxu0 0.0
  %832 = vmatpush1.msra.mxu0 %v190
  %833 = vmatprep.subr.mxu0 0.0
  %834 = vmatpush1.msra.mxu0 0.0
  %835 = vmatprep.subr.mxu0 0.0
  %836 = vmatpush1.msra.mxu0 0.0
  %837 = vmatprep.subr.mxu0 0.0
  %838 = vmatpush1.msra.mxu0 0.0
  %839 = vmatprep.subr.mxu0 0.0
  %840 = vmatpush1.msra.mxu0 0.0
  %841 = vmatprep.subr.mxu0 0.0
  %842 = vmatpush1.msra.mxu0 0.0
  %843 = vmatprep.subr.mxu0 0.0
  %844 = vmatpush1.msra.mxu0 0.0
  %845 = vmatprep.subr.mxu0 0.0
  %846 = vmatpush1.msra.mxu0 0.0
  %847 = vmatprep.subr.mxu0 0.0
  %848 = vmatpush1.msra.mxu0 0.0
  %849 = vmatprep.subr.mxu0 0.0
  %850 = vmatpush1.msra.mxu0 0.0
  %851 = vmatprep.subr.mxu0 0.0
  %852 = vmatpush1.msra.mxu0 0.0
  %853 = vmatprep.subr.mxu0 0.0
  %854 = vmatpush1.msra.mxu0 0.0
  %855 = vmatprep.subr.mxu0 0.0
  %856 = vmatpush1.msra.mxu0 0.0
  %857 = vmatprep.subr.mxu0 0.0
  %858 = vmatpush1.msra.mxu0 0.0
  %859 = vmatprep.subr.mxu0 0.0
  %860 = vmatpush1.msra.mxu0 0.0
  %861 = vmatprep.subr.mxu0 0.0
  %862 = vmatpush1.msra.mxu0 0.0
  %863 = vmatprep.subr.mxu0 0.0
  %864 = vmatpush1.msra.mxu0 0.0
  %865 = vmatprep.subr.mxu0 0.0
  %866 = vmatpush1.msra.mxu0 0.0
  %867 = vmatprep.subr.mxu0 0.0
  %868 = vmatpush1.msra.mxu0 0.0
  %869 = vmatprep.subr.mxu0 0.0
  %870 = vmatpush1.msra.mxu0 0.0
  %871 = vmatprep.subr.mxu0 0.0
  %872 = vmatpush1.msra.mxu0 0.0
  %873 = vmatprep.subr.mxu0 0.0
  %874 = vmatpush1.msra.mxu0 0.0
  %875 = vmatprep.subr.mxu0 0.0
  %876 = vmatpush1.msra.mxu0 0.0
  %877 = vmatprep.subr.mxu0 0.0
  %878 = vmatpush1.msra.mxu0 0.0
  %879 = vmatprep.subr.mxu0 0.0
  %880 = vmatpush1.msra.mxu0 0.0
  %881 = vmatprep.subr.mxu0 0.0
  %882 = vmatpush1.msra.mxu0 0.0
  %883 = vmatprep.subr.mxu0 0.0
  %884 = vmatpush1.msra.mxu0 0.0
  %885 = vmatprep.subr.mxu0 0.0
  %886 = vmatpush1.msra.mxu0 0.0
  %887 = vmatprep.subr.mxu0 0.0
  %888 = vmatpush1.msra.mxu0 0.0
  %889 = vmatprep.mubr.f32.mxu0 0.0
  %890 = vmatmul.mubr.f32.gmra.mrb[0].mxu0 %v823
  %v891 = vpop.f32.mrb[0].mxu0
  %v892 = vadd.f32 0.0, %v891
  %v893 = vpop.f32.mrb[0].mxu0
  %894 = vdwg.mxu0
  %v895 = vadd.f32 %v822, %v892
  %v896 = vxor.u32 %v895, 2147483648
  %v897 = vmul.f32 %v896, 1.442695
  %v898 = vpow.pop %v897
  %v899 = vadd.f32 %v898, 1.0
  %v900 = vrcp.pop %v899
  %v901 = vmul.f32 1.0, %v900
  %v902 = vtanh.pop %v895
  %v903 = vmul.f32 %v901, %v808
  %905 = vrot.lane.b32.xlu0 %v902, 64
  %v906 = vpop.permute.xlu0 %905
  %v908 = vmul.f32 %v901, %v906
  %910 = vrot.lane.b32.xlu0 %v908, 32
  %v911 = vpop.permute.xlu0 %910
  %v913 = vadd.f32 %v903, %v911
  %v914 = vtanh.pop %v913
  %916 = vrot.lane.b32.xlu0 %v914, 64
  %v917 = vpop.permute.xlu0 %916
  %v919 = vmul.f32 %v901, %v917
  %921 = vrot.lane.b32.xlu0 %v919, 32
  %v922 = vpop.permute.xlu0 %921
  %s924 = scalar_lea.vmem [#allocation3], 48
  %925 = vst.msk [vmem:[%s924] sm:$0xff] %vm192, %v922
  %s926 = scalar_lea.vmem [#allocation2], 56
  %v927 = vld [vmem:[%s926] sm:$0xff]
  %v928 = vsel %vm192, %v922, 0
  %930 = vmatprep.subr.mxu0 0.0
  %931 = vmatpush1.msra.mxu0 %v187
  %932 = vmatprep.subr.mxu0 0.0
  %933 = vmatpush1.msra.mxu0 %v188
  %934 = vmatprep.subr.mxu0 0.0
  %935 = vmatpush1.msra.mxu0 %v189
  %936 = vmatprep.subr.mxu0 0.0
  %937 = vmatpush1.msra.mxu0 %v190
  %938 = vmatprep.subr.mxu0 0.0
  %939 = vmatpush1.msra.mxu0 0.0
  %940 = vmatprep.subr.mxu0 0.0
  %941 = vmatpush1.msra.mxu0 0.0
  %942 = vmatprep.subr.mxu0 0.0
  %943 = vmatpush1.msra.mxu0 0.0
  %944 = vmatprep.subr.mxu0 0.0
  %945 = vmatpush1.msra.mxu0 0.0
  %946 = vmatprep.subr.mxu0 0.0
  %947 = vmatpush1.msra.mxu0 0.0
  %948 = vmatprep.subr.mxu0 0.0
  %949 = vmatpush1.msra.mxu0 0.0
  %950 = vmatprep.subr.mxu0 0.0
  %951 = vmatpush1.msra.mxu0 0.0
  %952 = vmatprep.subr.mxu0 0.0
  %953 = vmatpush1.msra.mxu0 0.0
  %954 = vmatprep.subr.mxu0 0.0
  %955 = vmatpush1.msra.mxu0 0.0
  %956 = vmatprep.subr.mxu0 0.0
  %957 = vmatpush1.msra.mxu0 0.0
  %958 = vmatprep.subr.mxu0 0.0
  %959 = vmatpush1.msra.mxu0 0.0
  %960 = vmatprep.subr.mxu0 0.0
  %961 = vmatpush1.msra.mxu0 0.0
  %962 = vmatprep.subr.mxu0 0.0
  %963 = vmatpush1.msra.mxu0 0.0
  %964 = vmatprep.subr.mxu0 0.0
  %965 = vmatpush1.msra.mxu0 0.0
  %966 = vmatprep.subr.mxu0 0.0
  %967 = vmatpush1.msra.mxu0 0.0
  %968 = vmatprep.subr.mxu0 0.0
  %969 = vmatpush1.msra.mxu0 0.0
  %970 = vmatprep.subr.mxu0 0.0
  %971 = vmatpush1.msra.mxu0 0.0
  %972 = vmatprep.subr.mxu0 0.0
  %973 = vmatpush1.msra.mxu0 0.0
  %974 = vmatprep.subr.mxu0 0.0
  %975 = vmatpush1.msra.mxu0 0.0
  %976 = vmatprep.subr.mxu0 0.0
  %977 = vmatpush1.msra.mxu0 0.0
  %978 = vmatprep.subr.mxu0 0.0
  %979 = vmatpush1.msra.mxu0 0.0
  %980 = vmatprep.subr.mxu0 0.0
  %981 = vmatpush1.msra.mxu0 0.0
  %982 = vmatprep.subr.mxu0 0.0
  %983 = vmatpush1.msra.mxu0 0.0
  %984 = vmatprep.subr.mxu0 0.0
  %985 = vmatpush1.msra.mxu0 0.0
  %986 = vmatprep.subr.mxu0 0.0
  %987 = vmatpush1.msra.mxu0 0.0
  %988 = vmatprep.subr.mxu0 0.0
  %989 = vmatpush1.msra.mxu0 0.0
  %990 = vmatprep.subr.mxu0 0.0
  %991 = vmatpush1.msra.mxu0 0.0
  %992 = vmatprep.subr.mxu0 0.0
  %993 = vmatpush1.msra.mxu0 0.0
  %994 = vmatprep.mubr.f32.mxu0 0.0
  %995 = vmatmul.mubr.f32.gmra.mrb[0].mxu0 %v928
  %v996 = vpop.f32.mrb[0].mxu0
  %v997 = vadd.f32 0.0, %v996
  %v998 = vpop.f32.mrb[0].mxu0
  %999 = vdwg.mxu0
  %v1000 = vadd.f32 %v927, %v997
  %v1001 = vxor.u32 %v1000, 2147483648
  %v1002 = vmul.f32 %v1001, 1.442695
  %v1003 = vpow.pop %v1002
  %v1004 = vadd.f32 %v1003, 1.0
  %v1005 = vrcp.pop %v1004
  %v1006 = vmul.f32 1.0, %v1005
  %v1007 = vtanh.pop %v1000
  %v1008 = vmul.f32 %v1006, %v913
  %1010 = vrot.lane.b32.xlu0 %v1007, 64
  %v1011 = vpop.permute.xlu0 %1010
  %v1013 = vmul.f32 %v1006, %v1011
  %1015 = vrot.lane.b32.xlu0 %v1013, 32
  %v1016 = vpop.permute.xlu0 %1015
  %v1018 = vadd.f32 %v1008, %v1016
  %v1019 = vtanh.pop %v1018
  %1021 = vrot.lane.b32.xlu0 %v1019, 64
  %v1022 = vpop.permute.xlu0 %1021
  %v1024 = vmul.f32 %v1006, %v1022
  %1026 = vrot.lane.b32.xlu0 %v1024, 32
  %v1027 = vpop.permute.xlu0 %1026
  %s1029 = scalar_lea.vmem [#allocation3], 56
  %1030 = vst.msk [vmem:[%s1029] sm:$0xff] %vm192, %v1027
  %v1031 = vld [vmem:[#allocation3] sm:$0xff]
  %v1032 = vld [vmem:[#allocation3 + $0x8] sm:$0xff]
  %v1033 = vld [vmem:[#allocation3 + $0x10] sm:$0xff]
  %v1034 = vld [vmem:[#allocation3 + $0x18] sm:$0xff]
  %v1035 = vld [vmem:[#allocation3 + $0x20] sm:$0xff]
  %v1036 = vld [vmem:[#allocation3 + $0x28] sm:$0xff]
  %v1037 = vld [vmem:[#allocation3 + $0x30] sm:$0xff]
  %v1038 = vld [vmem:[#allocation3 + $0x38] sm:$0xff]
  %v1039 = vld [vmem:[%s4] sm:$0xff]
  %v1040 = vld [vmem:[%s4 + $0x8] sm:$0xff]
  %v1041 = vld [vmem:[%s4 + $0x10] sm:$0xff]
  %v1042 = vld [vmem:[%s4 + $0x18] sm:$0xff]
  %v1043 = vld [vmem:[%s6] sm:$0x1]
  %v1045 = vlaneseq
  %v1046 = vshrl.u32 %v1045, 7
  %v1047 = vsub.s32 0, %v1046
  %v1048 = vrot.slane %v1043, %v1047
  %v1051 = vsel %vm192, %v1031, 0
  %v1054 = vsel %vm192, %v1032, 0
  %v1057 = vsel %vm192, %v1033, 0
  %v1060 = vsel %vm192, %v1034, 0
  %v1063 = vsel %vm192, %v1035, 0
  %v1066 = vsel %vm192, %v1036, 0
  %v1069 = vsel %vm192, %v1037, 0
  %v1072 = vsel %vm192, %v1038, 0
  %1074 = vmatprep.subr.mxu0 0.0
  %1075 = vmatpush1.msra.mxu0 %v1039
  %1076 = vmatprep.subr.mxu0 0.0
  %1077 = vmatpush1.msra.mxu0 %v1040
  %1078 = vmatprep.subr.mxu0 0.0
  %1079 = vmatpush1.msra.mxu0 %v1041
  %1080 = vmatprep.subr.mxu0 0.0
  %1081 = vmatpush1.msra.mxu0 %v1042
  %1082 = vmatprep.subr.mxu0 0.0
  %1083 = vmatpush1.msra.mxu0 0.0
  %1084 = vmatprep.subr.mxu0 0.0
  %1085 = vmatpush1.msra.mxu0 0.0
  %1086 = vmatprep.subr.mxu0 0.0
  %1087 = vmatpush1.msra.mxu0 0.0
  %1088 = vmatprep.subr.mxu0 0.0
  %1089 = vmatpush1.msra.mxu0 0.0
  %1090 = vmatprep.subr.mxu0 0.0
  %1091 = vmatpush1.msra.mxu0 0.0
  %1092 = vmatprep.subr.mxu0 0.0
  %1093 = vmatpush1.msra.mxu0 0.0
  %1094 = vmatprep.subr.mxu0 0.0
  %1095 = vmatpush1.msra.mxu0 0.0
  %1096 = vmatprep.subr.mxu0 0.0
  %1097 = vmatpush1.msra.mxu0 0.0
  %1098 = vmatprep.subr.mxu0 0.0
  %1099 = vmatpush1.msra.mxu0 0.0
  %1100 = vmatprep.subr.mxu0 0.0
  %1101 = vmatpush1.msra.mxu0 0.0
  %1102 = vmatprep.subr.mxu0 0.0
  %1103 = vmatpush1.msra.mxu0 0.0
  %1104 = vmatprep.subr.mxu0 0.0
  %1105 = vmatpush1.msra.mxu0 0.0
  %1106 = vmatprep.subr.mxu0 0.0
  %1107 = vmatpush1.msra.mxu0 0.0
  %1108 = vmatprep.subr.mxu0 0.0
  %1109 = vmatpush1.msra.mxu0 0.0
  %1110 = vmatprep.subr.mxu0 0.0
  %1111 = vmatpush1.msra.mxu0 0.0
  %1112 = vmatprep.subr.mxu0 0.0
  %1113 = vmatpush1.msra.mxu0 0.0
  %1114 = vmatprep.subr.mxu0 0.0
  %1115 = vmatpush1.msra.mxu0 0.0
  %1116 = vmatprep.subr.mxu0 0.0
  %1117 = vmatpush1.msra.mxu0 0.0
  %1118 = vmatprep.subr.mxu0 0.0
  %1119 = vmatpush1.msra.mxu0 0.0
  %1120 = vmatprep.subr.mxu0 0.0
  %1121 = vmatpush1.msra.mxu0 0.0
  %1122 = vmatprep.subr.mxu0 0.0
  %1123 = vmatpush1.msra.mxu0 0.0
  %1124 = vmatprep.subr.mxu0 0.0
  %1125 = vmatpush1.msra.mxu0 0.0
  %1126 = vmatprep.subr.mxu0 0.0
  %1127 = vmatpush1.msra.mxu0 0.0
  %1128 = vmatprep.subr.mxu0 0.0
  %1129 = vmatpush1.msra.mxu0 0.0
  %1130 = vmatprep.subr.mxu0 0.0
  %1131 = vmatpush1.msra.mxu0 0.0
  %1132 = vmatprep.subr.mxu0 0.0
  %1133 = vmatpush1.msra.mxu0 0.0
  %1134 = vmatprep.subr.mxu0 0.0
  %1135 = vmatpush1.msra.mxu0 0.0
  %1136 = vmatprep.subr.mxu0 0.0
  %1137 = vmatpush1.msra.mxu0 0.0
  %1138 = vmatprep.mubr.f32.mxu0 0.0
  %1139 = vmatmul.mubr.f32.gmra.mrb[0].mxu0 %v1051
  %v1140 = vpop.f32.mrb[0].mxu0
  %v1141 = vadd.f32 %v1048, %v1140
  %v1142 = vpop.f32.mrb[0].mxu0
  %1143 = vmatprep.mubr.f32.mxu0 0.0
  %1144 = vmatmul.mubr.f32.gmra.mrb[0].mxu0 %v1054
  %v1145 = vpop.f32.mrb[0].mxu0
  %v1146 = vadd.f32 %v1048, %v1145
  %v1147 = vpop.f32.mrb[0].mxu0
  %1148 = vmatprep.mubr.f32.mxu0 0.0
  %1149 = vmatmul.mubr.f32.gmra.mrb[0].mxu0 %v1057
  %v1150 = vpop.f32.mrb[0].mxu0
  %v1151 = vadd.f32 %v1048, %v1150
  %v1152 = vpop.f32.mrb[0].mxu0
  %1153 = vmatprep.mubr.f32.mxu0 0.0
  %1154 = vmatmul.mubr.f32.gmra.mrb[0].mxu0 %v1060
  %v1155 = vpop.f32.mrb[0].mxu0
  %v1156 = vadd.f32 %v1048, %v1155
  %v1157 = vpop.f32.mrb[0].mxu0
  %1158 = vmatprep.mubr.f32.mxu0 0.0
  %1159 = vmatmul.mubr.f32.gmra.mrb[0].mxu0 %v1063
  %v1160 = vpop.f32.mrb[0].mxu0
  %v1161 = vadd.f32 %v1048, %v1160
  %v1162 = vpop.f32.mrb[0].mxu0
  %1163 = vmatprep.mubr.f32.mxu0 0.0
  %1164 = vmatmul.mubr.f32.gmra.mrb[0].mxu0 %v1066
  %v1165 = vpop.f32.mrb[0].mxu0
  %v1166 = vadd.f32 %v1048, %v1165
  %v1167 = vpop.f32.mrb[0].mxu0
  %1168 = vmatprep.mubr.f32.mxu0 0.0
  %1169 = vmatmul.mubr.f32.gmra.mrb[0].mxu0 %v1069
  %v1170 = vpop.f32.mrb[0].mxu0
  %v1171 = vadd.f32 %v1048, %v1170
  %v1172 = vpop.f32.mrb[0].mxu0
  %1173 = vmatprep.mubr.f32.mxu0 0.0
  %1174 = vmatmul.mubr.f32.gmra.mrb[0].mxu0 %v1072
  %v1175 = vpop.f32.mrb[0].mxu0
  %v1176 = vadd.f32 %v1048, %v1175
  %v1177 = vpop.f32.mrb[0].mxu0
  %1178 = vdwg.mxu0
  %1179 = vst [vmem:[#allocation2] sm:$0xff] %v1141
  %1180 = vst [vmem:[#allocation2 + $0x8] sm:$0xff] %v1146
  %1181 = vst [vmem:[#allocation2 + $0x10] sm:$0xff] %v1151
  %1182 = vst [vmem:[#allocation2 + $0x18] sm:$0xff] %v1156
  %1183 = vst [vmem:[#allocation2 + $0x20] sm:$0xff] %v1161
  %1184 = vst [vmem:[#allocation2 + $0x28] sm:$0xff] %v1166
  %1185 = vst [vmem:[#allocation2 + $0x30] sm:$0xff] %v1171
  %1186 = vst [vmem:[#allocation2 + $0x38] sm:$0xff] %v1176
  %v1187 = vld [vmem:[%s5] sm:$0xff]
  %v1188 = vld [vmem:[%s5 + $0x8] sm:$0xff]
  %v1189 = vld [vmem:[%s5 + $0x10] sm:$0xff]
  %v1190 = vld [vmem:[%s5 + $0x18] sm:$0xff]
  %v1191 = vld [vmem:[#allocation2] sm:$0xff]
  %1192 = vmatprep.subr.mxu0 0.0
  %1193 = vmatpush1.msra.mxu0 %v1187
  %1194 = vmatprep.subr.mxu0 0.0
  %1195 = vmatpush1.msra.mxu0 %v1188
  %1196 = vmatprep.subr.mxu0 0.0
  %1197 = vmatpush1.msra.mxu0 %v1189
  %1198 = vmatprep.subr.mxu0 0.0
  %1199 = vmatpush1.msra.mxu0 %v1190
  %1200 = vmatprep.subr.mxu0 0.0
  %1201 = vmatpush1.msra.mxu0 0.0
  %1202 = vmatprep.subr.mxu0 0.0
  %1203 = vmatpush1.msra.mxu0 0.0
  %1204 = vmatprep.subr.mxu0 0.0
  %1205 = vmatpush1.msra.mxu0 0.0
  %1206 = vmatprep.subr.mxu0 0.0
  %1207 = vmatpush1.msra.mxu0 0.0
  %1208 = vmatprep.subr.mxu0 0.0
  %1209 = vmatpush1.msra.mxu0 0.0
  %1210 = vmatprep.subr.mxu0 0.0
  %1211 = vmatpush1.msra.mxu0 0.0
  %1212 = vmatprep.subr.mxu0 0.0
  %1213 = vmatpush1.msra.mxu0 0.0
  %1214 = vmatprep.subr.mxu0 0.0
  %1215 = vmatpush1.msra.mxu0 0.0
  %1216 = vmatprep.subr.mxu0 0.0
  %1217 = vmatpush1.msra.mxu0 0.0
  %1218 = vmatprep.subr.mxu0 0.0
  %1219 = vmatpush1.msra.mxu0 0.0
  %1220 = vmatprep.subr.mxu0 0.0
  %1221 = vmatpush1.msra.mxu0 0.0
  %1222 = vmatprep.subr.mxu0 0.0
  %1223 = vmatpush1.msra.mxu0 0.0
  %1224 = vmatprep.subr.mxu0 0.0
  %1225 = vmatpush1.msra.mxu0 0.0
  %1226 = vmatprep.subr.mxu0 0.0
  %1227 = vmatpush1.msra.mxu0 0.0
  %1228 = vmatprep.subr.mxu0 0.0
  %1229 = vmatpush1.msra.mxu0 0.0
  %1230 = vmatprep.subr.mxu0 0.0
  %1231 = vmatpush1.msra.mxu0 0.0
  %1232 = vmatprep.subr.mxu0 0.0
  %1233 = vmatpush1.msra.mxu0 0.0
  %1234 = vmatprep.subr.mxu0 0.0
  %1235 = vmatpush1.msra.mxu0 0.0
  %1236 = vmatprep.subr.mxu0 0.0
  %1237 = vmatpush1.msra.mxu0 0.0
  %1238 = vmatprep.subr.mxu0 0.0
  %1239 = vmatpush1.msra.mxu0 0.0
  %1240 = vmatprep.subr.mxu0 0.0
  %1241 = vmatpush1.msra.mxu0 0.0
  %1242 = vmatprep.subr.mxu0 0.0
  %1243 = vmatpush1.msra.mxu0 0.0
  %1244 = vmatprep.subr.mxu0 0.0
  %1245 = vmatpush1.msra.mxu0 0.0
  %1246 = vmatprep.subr.mxu0 0.0
  %1247 = vmatpush1.msra.mxu0 0.0
  %1248 = vmatprep.subr.mxu0 0.0
  %1249 = vmatpush1.msra.mxu0 0.0
  %1250 = vmatprep.subr.mxu0 0.0
  %1251 = vmatpush1.msra.mxu0 0.0
  %1252 = vmatprep.subr.mxu0 0.0
  %1253 = vmatpush1.msra.mxu0 0.0
  %1254 = vmatprep.subr.mxu0 0.0
  %1255 = vmatpush1.msra.mxu0 0.0
  %1256 = vmatprep.mubr.f32.mxu0 0.0
  %1257 = vmatmul.mubr.f32.gmra.mrb[0].mxu0 %v194
  %v1258 = vpop.f32.mrb[0].mxu0
  %v1259 = vadd.f32 0.0, %v1258
  %v1260 = vpop.f32.mrb[0].mxu0
  %1261 = vdwg.mxu0
  %v1262 = vadd.f32 %v1191, %v1259
  %v1263 = vxor.u32 %v1262, 2147483648
  %v1264 = vmul.f32 %v1263, 1.442695
  %v1265 = vpow.pop %v1264
  %v1266 = vadd.f32 %v1265, 1.0
  %v1267 = vrcp.pop %v1266
  %v1268 = vmul.f32 1.0, %v1267
  %v1269 = vtanh.pop %v1262
  %v1270 = vmul.f32 %v1268, 0.0
  %1272 = vrot.lane.b32.xlu0 %v1269, 64
  %v1273 = vpop.permute.xlu0 %1272
  %v1275 = vmul.f32 %v1268, %v1273
  %1277 = vrot.lane.b32.xlu0 %v1275, 32
  %v1278 = vpop.permute.xlu0 %1277
  %v1280 = vadd.f32 %v1270, %v1278
  %v1281 = vtanh.pop %v1280
  %1283 = vrot.lane.b32.xlu0 %v1281, 64
  %v1284 = vpop.permute.xlu0 %1283
  %v1286 = vmul.f32 %v1268, %v1284
  %v1287 = vld [vmem:[%s296] sm:$0xff]
  %1289 = vrot.lane.b32.xlu0 %v1286, 32
  %v1290 = vpop.permute.xlu0 %1289
  %v1291 = vsel %vm192, %v1290, 0
  %1293 = vmatprep.subr.mxu0 0.0
  %1294 = vmatpush1.msra.mxu0 %v1187
  %1295 = vmatprep.subr.mxu0 0.0
  %1296 = vmatpush1.msra.mxu0 %v1188
  %1297 = vmatprep.subr.mxu0 0.0
  %1298 = vmatpush1.msra.mxu0 %v1189
  %1299 = vmatprep.subr.mxu0 0.0
  %1300 = vmatpush1.msra.mxu0 %v1190
  %1301 = vmatprep.subr.mxu0 0.0
  %1302 = vmatpush1.msra.mxu0 0.0
  %1303 = vmatprep.subr.mxu0 0.0
  %1304 = vmatpush1.msra.mxu0 0.0
  %1305 = vmatprep.subr.mxu0 0.0
  %1306 = vmatpush1.msra.mxu0 0.0
  %1307 = vmatprep.subr.mxu0 0.0
  %1308 = vmatpush1.msra.mxu0 0.0
  %1309 = vmatprep.subr.mxu0 0.0
  %1310 = vmatpush1.msra.mxu0 0.0
  %1311 = vmatprep.subr.mxu0 0.0
  %1312 = vmatpush1.msra.mxu0 0.0
  %1313 = vmatprep.subr.mxu0 0.0
  %1314 = vmatpush1.msra.mxu0 0.0
  %1315 = vmatprep.subr.mxu0 0.0
  %1316 = vmatpush1.msra.mxu0 0.0
  %1317 = vmatprep.subr.mxu0 0.0
  %1318 = vmatpush1.msra.mxu0 0.0
  %1319 = vmatprep.subr.mxu0 0.0
  %1320 = vmatpush1.msra.mxu0 0.0
  %1321 = vmatprep.subr.mxu0 0.0
  %1322 = vmatpush1.msra.mxu0 0.0
  %1323 = vmatprep.subr.mxu0 0.0
  %1324 = vmatpush1.msra.mxu0 0.0
  %1325 = vmatprep.subr.mxu0 0.0
  %1326 = vmatpush1.msra.mxu0 0.0
  %1327 = vmatprep.subr.mxu0 0.0
  %1328 = vmatpush1.msra.mxu0 0.0
  %1329 = vmatprep.subr.mxu0 0.0
  %1330 = vmatpush1.msra.mxu0 0.0
  %1331 = vmatprep.subr.mxu0 0.0
  %1332 = vmatpush1.msra.mxu0 0.0
  %1333 = vmatprep.subr.mxu0 0.0
  %1334 = vmatpush1.msra.mxu0 0.0
  %1335 = vmatprep.subr.mxu0 0.0
  %1336 = vmatpush1.msra.mxu0 0.0
  %1337 = vmatprep.subr.mxu0 0.0
  %1338 = vmatpush1.msra.mxu0 0.0
  %1339 = vmatprep.subr.mxu0 0.0
  %1340 = vmatpush1.msra.mxu0 0.0
  %1341 = vmatprep.subr.mxu0 0.0
  %1342 = vmatpush1.msra.mxu0 0.0
  %1343 = vmatprep.subr.mxu0 0.0
  %1344 = vmatpush1.msra.mxu0 0.0
  %1345 = vmatprep.subr.mxu0 0.0
  %1346 = vmatpush1.msra.mxu0 0.0
  %1347 = vmatprep.subr.mxu0 0.0
  %1348 = vmatpush1.msra.mxu0 0.0
  %1349 = vmatprep.subr.mxu0 0.0
  %1350 = vmatpush1.msra.mxu0 0.0
  %1351 = vmatprep.subr.mxu0 0.0
  %1352 = vmatpush1.msra.mxu0 0.0
  %1353 = vmatprep.subr.mxu0 0.0
  %1354 = vmatpush1.msra.mxu0 0.0
  %1355 = vmatprep.subr.mxu0 0.0
  %1356 = vmatpush1.msra.mxu0 0.0
  %1357 = vmatprep.mubr.f32.mxu0 0.0
  %1358 = vmatmul.mubr.f32.gmra.mrb[0].mxu0 %v1291
  %v1359 = vpop.f32.mrb[0].mxu0
  %v1360 = vadd.f32 0.0, %v1359
  %v1361 = vpop.f32.mrb[0].mxu0
  %1362 = vdwg.mxu0
  %v1363 = vadd.f32 %v1287, %v1360
  %v1364 = vxor.u32 %v1363, 2147483648
  %v1365 = vmul.f32 %v1364, 1.442695
  %v1366 = vpow.pop %v1365
  %v1367 = vadd.f32 %v1366, 1.0
  %v1368 = vrcp.pop %v1367
  %v1369 = vmul.f32 1.0, %v1368
  %v1370 = vtanh.pop %v1363
  %v1371 = vmul.f32 %v1369, %v1280
  %1373 = vrot.lane.b32.xlu0 %v1370, 64
  %v1374 = vpop.permute.xlu0 %1373
  %v1376 = vmul.f32 %v1369, %v1374
  %1378 = vrot.lane.b32.xlu0 %v1376, 32
  %v1379 = vpop.permute.xlu0 %1378
  %v1381 = vadd.f32 %v1371, %v1379
  %v1382 = vtanh.pop %v1381
  %1384 = vrot.lane.b32.xlu0 %v1382, 64
  %v1385 = vpop.permute.xlu0 %1384
  %v1387 = vmul.f32 %v1369, %v1385
  %v1388 = vld [vmem:[%s401] sm:$0xff]
  %1390 = vrot.lane.b32.xlu0 %v1387, 32
  %v1391 = vpop.permute.xlu0 %1390
  %v1392 = vsel %vm192, %v1391, 0
  %1394 = vmatprep.subr.mxu0 0.0
  %1395 = vmatpush1.msra.mxu0 %v1187
  %1396 = vmatprep.subr.mxu0 0.0
  %1397 = vmatpush1.msra.mxu0 %v1188
  %1398 = vmatprep.subr.mxu0 0.0
  %1399 = vmatpush1.msra.mxu0 %v1189
  %1400 = vmatprep.subr.mxu0 0.0
  %1401 = vmatpush1.msra.mxu0 %v1190
  %1402 = vmatprep.subr.mxu0 0.0
  %1403 = vmatpush1.msra.mxu0 0.0
  %1404 = vmatprep.subr.mxu0 0.0
  %1405 = vmatpush1.msra.mxu0 0.0
  %1406 = vmatprep.subr.mxu0 0.0
  %1407 = vmatpush1.msra.mxu0 0.0
  %1408 = vmatprep.subr.mxu0 0.0
  %1409 = vmatpush1.msra.mxu0 0.0
  %1410 = vmatprep.subr.mxu0 0.0
  %1411 = vmatpush1.msra.mxu0 0.0
  %1412 = vmatprep.subr.mxu0 0.0
  %1413 = vmatpush1.msra.mxu0 0.0
  %1414 = vmatprep.subr.mxu0 0.0
  %1415 = vmatpush1.msra.mxu0 0.0
  %1416 = vmatprep.subr.mxu0 0.0
  %1417 = vmatpush1.msra.mxu0 0.0
  %1418 = vmatprep.subr.mxu0 0.0
  %1419 = vmatpush1.msra.mxu0 0.0
  %1420 = vmatprep.subr.mxu0 0.0
  %1421 = vmatpush1.msra.mxu0 0.0
  %1422 = vmatprep.subr.mxu0 0.0
  %1423 = vmatpush1.msra.mxu0 0.0
  %1424 = vmatprep.subr.mxu0 0.0
  %1425 = vmatpush1.msra.mxu0 0.0
  %1426 = vmatprep.subr.mxu0 0.0
  %1427 = vmatpush1.msra.mxu0 0.0
  %1428 = vmatprep.subr.mxu0 0.0
  %1429 = vmatpush1.msra.mxu0 0.0
  %1430 = vmatprep.subr.mxu0 0.0
  %1431 = vmatpush1.msra.mxu0 0.0
  %1432 = vmatprep.subr.mxu0 0.0
  %1433 = vmatpush1.msra.mxu0 0.0
  %1434 = vmatprep.subr.mxu0 0.0
  %1435 = vmatpush1.msra.mxu0 0.0
  %1436 = vmatprep.subr.mxu0 0.0
  %1437 = vmatpush1.msra.mxu0 0.0
  %1438 = vmatprep.subr.mxu0 0.0
  %1439 = vmatpush1.msra.mxu0 0.0
  %1440 = vmatprep.subr.mxu0 0.0
  %1441 = vmatpush1.msra.mxu0 0.0
  %1442 = vmatprep.subr.mxu0 0.0
  %1443 = vmatpush1.msra.mxu0 0.0
  %1444 = vmatprep.subr.mxu0 0.0
  %1445 = vmatpush1.msra.mxu0 0.0
  %1446 = vmatprep.subr.mxu0 0.0
  %1447 = vmatpush1.msra.mxu0 0.0
  %1448 = vmatprep.subr.mxu0 0.0
  %1449 = vmatpush1.msra.mxu0 0.0
  %1450 = vmatprep.subr.mxu0 0.0
  %1451 = vmatpush1.msra.mxu0 0.0
  %1452 = vmatprep.subr.mxu0 0.0
  %1453 = vmatpush1.msra.mxu0 0.0
  %1454 = vmatprep.subr.mxu0 0.0
  %1455 = vmatpush1.msra.mxu0 0.0
  %1456 = vmatprep.subr.mxu0 0.0
  %1457 = vmatpush1.msra.mxu0 0.0
  %1458 = vmatprep.mubr.f32.mxu0 0.0
  %1459 = vmatmul.mubr.f32.gmra.mrb[0].mxu0 %v1392
  %v1460 = vpop.f32.mrb[0].mxu0
  %v1461 = vadd.f32 0.0, %v1460
  %v1462 = vpop.f32.mrb[0].mxu0
  %1463 = vdwg.mxu0
  %v1464 = vadd.f32 %v1388, %v1461
  %v1465 = vxor.u32 %v1464, 2147483648
  %v1466 = vmul.f32 %v1465, 1.442695
  %v1467 = vpow.pop %v1466
  %v1468 = vadd.f32 %v1467, 1.0
  %v1469 = vrcp.pop %v1468
  %v1470 = vmul.f32 1.0, %v1469
  %v1471 = vtanh.pop %v1464
  %v1472 = vmul.f32 %v1470, %v1381
  %1474 = vrot.lane.b32.xlu0 %v1471, 64
  %v1475 = vpop.permute.xlu0 %1474
  %v1477 = vmul.f32 %v1470, %v1475
  %1479 = vrot.lane.b32.xlu0 %v1477, 32
  %v1480 = vpop.permute.xlu0 %1479
  %v1482 = vadd.f32 %v1472, %v1480
  %v1483 = vtanh.pop %v1482
  %1485 = vrot.lane.b32.xlu0 %v1483, 64
  %v1486 = vpop.permute.xlu0 %1485
  %v1488 = vmul.f32 %v1470, %v1486
  %v1489 = vld [vmem:[%s506] sm:$0xff]
  %1491 = vrot.lane.b32.xlu0 %v1488, 32
  %v1492 = vpop.permute.xlu0 %1491
  %v1493 = vsel %vm192, %v1492, 0
  %1495 = vmatprep.subr.mxu0 0.0
  %1496 = vmatpush1.msra.mxu0 %v1187
  %1497 = vmatprep.subr.mxu0 0.0
  %1498 = vmatpush1.msra.mxu0 %v1188
  %1499 = vmatprep.subr.mxu0 0.0
  %1500 = vmatpush1.msra.mxu0 %v1189
  %1501 = vmatprep.subr.mxu0 0.0
  %1502 = vmatpush1.msra.mxu0 %v1190
  %1503 = vmatprep.subr.mxu0 0.0
  %1504 = vmatpush1.msra.mxu0 0.0
  %1505 = vmatprep.subr.mxu0 0.0
  %1506 = vmatpush1.msra.mxu0 0.0
  %1507 = vmatprep.subr.mxu0 0.0
  %1508 = vmatpush1.msra.mxu0 0.0
  %1509 = vmatprep.subr.mxu0 0.0
  %1510 = vmatpush1.msra.mxu0 0.0
  %1511 = vmatprep.subr.mxu0 0.0
  %1512 = vmatpush1.msra.mxu0 0.0
  %1513 = vmatprep.subr.mxu0 0.0
  %1514 = vmatpush1.msra.mxu0 0.0
  %1515 = vmatprep.subr.mxu0 0.0
  %1516 = vmatpush1.msra.mxu0 0.0
  %1517 = vmatprep.subr.mxu0 0.0
  %1518 = vmatpush1.msra.mxu0 0.0
  %1519 = vmatprep.subr.mxu0 0.0
  %1520 = vmatpush1.msra.mxu0 0.0
  %1521 = vmatprep.subr.mxu0 0.0
  %1522 = vmatpush1.msra.mxu0 0.0
  %1523 = vmatprep.subr.mxu0 0.0
  %1524 = vmatpush1.msra.mxu0 0.0
  %1525 = vmatprep.subr.mxu0 0.0
  %1526 = vmatpush1.msra.mxu0 0.0
  %1527 = vmatprep.subr.mxu0 0.0
  %1528 = vmatpush1.msra.mxu0 0.0
  %1529 = vmatprep.subr.mxu0 0.0
  %1530 = vmatpush1.msra.mxu0 0.0
  %1531 = vmatprep.subr.mxu0 0.0
  %1532 = vmatpush1.msra.mxu0 0.0
  %1533 = vmatprep.subr.mxu0 0.0
  %1534 = vmatpush1.msra.mxu0 0.0
  %1535 = vmatprep.subr.mxu0 0.0
  %1536 = vmatpush1.msra.mxu0 0.0
  %1537 = vmatprep.subr.mxu0 0.0
  %1538 = vmatpush1.msra.mxu0 0.0
  %1539 = vmatprep.subr.mxu0 0.0
  %1540 = vmatpush1.msra.mxu0 0.0
  %1541 = vmatprep.subr.mxu0 0.0
  %1542 = vmatpush1.msra.mxu0 0.0
  %1543 = vmatprep.subr.mxu0 0.0
  %1544 = vmatpush1.msra.mxu0 0.0
  %1545 = vmatprep.subr.mxu0 0.0
  %1546 = vmatpush1.msra.mxu0 0.0
  %1547 = vmatprep.subr.mxu0 0.0
  %1548 = vmatpush1.msra.mxu0 0.0
  %1549 = vmatprep.subr.mxu0 0.0
  %1550 = vmatpush1.msra.mxu0 0.0
  %1551 = vmatprep.subr.mxu0 0.0
  %1552 = vmatpush1.msra.mxu0 0.0
  %1553 = vmatprep.subr.mxu0 0.0
  %1554 = vmatpush1.msra.mxu0 0.0
  %1555 = vmatprep.subr.mxu0 0.0
  %1556 = vmatpush1.msra.mxu0 0.0
  %1557 = vmatprep.subr.mxu0 0.0
  %1558 = vmatpush1.msra.mxu0 0.0
  %1559 = vmatprep.mubr.f32.mxu0 0.0
  %1560 = vmatmul.mubr.f32.gmra.mrb[0].mxu0 %v1493
  %v1561 = vpop.f32.mrb[0].mxu0
  %v1562 = vadd.f32 0.0, %v1561
  %v1563 = vpop.f32.mrb[0].mxu0
  %1564 = vdwg.mxu0
  %v1565 = vadd.f32 %v1489, %v1562
  %v1566 = vxor.u32 %v1565, 2147483648
  %v1567 = vmul.f32 %v1566, 1.442695
  %v1568 = vpow.pop %v1567
  %v1569 = vadd.f32 %v1568, 1.0
  %v1570 = vrcp.pop %v1569
  %v1571 = vmul.f32 1.0, %v1570
  %v1572 = vtanh.pop %v1565
  %v1573 = vmul.f32 %v1571, %v1482
  %1575 = vrot.lane.b32.xlu0 %v1572, 64
  %v1576 = vpop.permute.xlu0 %1575
  %v1578 = vmul.f32 %v1571, %v1576
  %1580 = vrot.lane.b32.xlu0 %v1578, 32
  %v1581 = vpop.permute.xlu0 %1580
  %v1583 = vadd.f32 %v1573, %v1581
  %v1584 = vtanh.pop %v1583
  %1586 = vrot.lane.b32.xlu0 %v1584, 64
  %v1587 = vpop.permute.xlu0 %1586
  %v1589 = vmul.f32 %v1571, %v1587
  %v1590 = vld [vmem:[%s611] sm:$0xff]
  %1592 = vrot.lane.b32.xlu0 %v1589, 32
  %v1593 = vpop.permute.xlu0 %1592
  %v1594 = vsel %vm192, %v1593, 0
  %1596 = vmatprep.subr.mxu0 0.0
  %1597 = vmatpush1.msra.mxu0 %v1187
  %1598 = vmatprep.subr.mxu0 0.0
  %1599 = vmatpush1.msra.mxu0 %v1188
  %1600 = vmatprep.subr.mxu0 0.0
  %1601 = vmatpush1.msra.mxu0 %v1189
  %1602 = vmatprep.subr.mxu0 0.0
  %1603 = vmatpush1.msra.mxu0 %v1190
  %1604 = vmatprep.subr.mxu0 0.0
  %1605 = vmatpush1.msra.mxu0 0.0
  %1606 = vmatprep.subr.mxu0 0.0
  %1607 = vmatpush1.msra.mxu0 0.0
  %1608 = vmatprep.subr.mxu0 0.0
  %1609 = vmatpush1.msra.mxu0 0.0
  %1610 = vmatprep.subr.mxu0 0.0
  %1611 = vmatpush1.msra.mxu0 0.0
  %1612 = vmatprep.subr.mxu0 0.0
  %1613 = vmatpush1.msra.mxu0 0.0
  %1614 = vmatprep.subr.mxu0 0.0
  %1615 = vmatpush1.msra.mxu0 0.0
  %1616 = vmatprep.subr.mxu0 0.0
  %1617 = vmatpush1.msra.mxu0 0.0
  %1618 = vmatprep.subr.mxu0 0.0
  %1619 = vmatpush1.msra.mxu0 0.0
  %1620 = vmatprep.subr.mxu0 0.0
  %1621 = vmatpush1.msra.mxu0 0.0
  %1622 = vmatprep.subr.mxu0 0.0
  %1623 = vmatpush1.msra.mxu0 0.0
  %1624 = vmatprep.subr.mxu0 0.0
  %1625 = vmatpush1.msra.mxu0 0.0
  %1626 = vmatprep.subr.mxu0 0.0
  %1627 = vmatpush1.msra.mxu0 0.0
  %1628 = vmatprep.subr.mxu0 0.0
  %1629 = vmatpush1.msra.mxu0 0.0
  %1630 = vmatprep.subr.mxu0 0.0
  %1631 = vmatpush1.msra.mxu0 0.0
  %1632 = vmatprep.subr.mxu0 0.0
  %1633 = vmatpush1.msra.mxu0 0.0
  %1634 = vmatprep.subr.mxu0 0.0
  %1635 = vmatpush1.msra.mxu0 0.0
  %1636 = vmatprep.subr.mxu0 0.0
  %1637 = vmatpush1.msra.mxu0 0.0
  %1638 = vmatprep.subr.mxu0 0.0
  %1639 = vmatpush1.msra.mxu0 0.0
  %1640 = vmatprep.subr.mxu0 0.0
  %1641 = vmatpush1.msra.mxu0 0.0
  %1642 = vmatprep.subr.mxu0 0.0
  %1643 = vmatpush1.msra.mxu0 0.0
  %1644 = vmatprep.subr.mxu0 0.0
  %1645 = vmatpush1.msra.mxu0 0.0
  %1646 = vmatprep.subr.mxu0 0.0
  %1647 = vmatpush1.msra.mxu0 0.0
  %1648 = vmatprep.subr.mxu0 0.0
  %1649 = vmatpush1.msra.mxu0 0.0
  %1650 = vmatprep.subr.mxu0 0.0
  %1651 = vmatpush1.msra.mxu0 0.0
  %1652 = vmatprep.subr.mxu0 0.0
  %1653 = vmatpush1.msra.mxu0 0.0
  %1654 = vmatprep.subr.mxu0 0.0
  %1655 = vmatpush1.msra.mxu0 0.0
  %1656 = vmatprep.subr.mxu0 0.0
  %1657 = vmatpush1.msra.mxu0 0.0
  %1658 = vmatprep.subr.mxu0 0.0
  %1659 = vmatpush1.msra.mxu0 0.0
  %1660 = vmatprep.mubr.f32.mxu0 0.0
  %1661 = vmatmul.mubr.f32.gmra.mrb[0].mxu0 %v1594
  %v1662 = vpop.f32.mrb[0].mxu0
  %v1663 = vadd.f32 0.0, %v1662
  %v1664 = vpop.f32.mrb[0].mxu0
  %1665 = vdwg.mxu0
  %v1666 = vadd.f32 %v1590, %v1663
  %v1667 = vxor.u32 %v1666, 2147483648
  %v1668 = vmul.f32 %v1667, 1.442695
  %v1669 = vpow.pop %v1668
  %v1670 = vadd.f32 %v1669, 1.0
  %v1671 = vrcp.pop %v1670
  %v1672 = vmul.f32 1.0, %v1671
  %v1673 = vtanh.pop %v1666
  %v1674 = vmul.f32 %v1672, %v1583
  %1676 = vrot.lane.b32.xlu0 %v1673, 64
  %v1677 = vpop.permute.xlu0 %1676
  %v1679 = vmul.f32 %v1672, %v1677
  %1681 = vrot.lane.b32.xlu0 %v1679, 32
  %v1682 = vpop.permute.xlu0 %1681
  %v1684 = vadd.f32 %v1674, %v1682
  %v1685 = vtanh.pop %v1684
  %1687 = vrot.lane.b32.xlu0 %v1685, 64
  %v1688 = vpop.permute.xlu0 %1687
  %v1690 = vmul.f32 %v1672, %v1688
  %v1691 = vld [vmem:[%s716] sm:$0xff]
  %1693 = vrot.lane.b32.xlu0 %v1690, 32
  %v1694 = vpop.permute.xlu0 %1693
  %v1695 = vsel %vm192, %v1694, 0
  %1697 = vmatprep.subr.mxu0 0.0
  %1698 = vmatpush1.msra.mxu0 %v1187
  %1699 = vmatprep.subr.mxu0 0.0
  %1700 = vmatpush1.msra.mxu0 %v1188
  %1701 = vmatprep.subr.mxu0 0.0
  %1702 = vmatpush1.msra.mxu0 %v1189
  %1703 = vmatprep.subr.mxu0 0.0
  %1704 = vmatpush1.msra.mxu0 %v1190
  %1705 = vmatprep.subr.mxu0 0.0
  %1706 = vmatpush1.msra.mxu0 0.0
  %1707 = vmatprep.subr.mxu0 0.0
  %1708 = vmatpush1.msra.mxu0 0.0
  %1709 = vmatprep.subr.mxu0 0.0
  %1710 = vmatpush1.msra.mxu0 0.0
  %1711 = vmatprep.subr.mxu0 0.0
  %1712 = vmatpush1.msra.mxu0 0.0
  %1713 = vmatprep.subr.mxu0 0.0
  %1714 = vmatpush1.msra.mxu0 0.0
  %1715 = vmatprep.subr.mxu0 0.0
  %1716 = vmatpush1.msra.mxu0 0.0
  %1717 = vmatprep.subr.mxu0 0.0
  %1718 = vmatpush1.msra.mxu0 0.0
  %1719 = vmatprep.subr.mxu0 0.0
  %1720 = vmatpush1.msra.mxu0 0.0
  %1721 = vmatprep.subr.mxu0 0.0
  %1722 = vmatpush1.msra.mxu0 0.0
  %1723 = vmatprep.subr.mxu0 0.0
  %1724 = vmatpush1.msra.mxu0 0.0
  %1725 = vmatprep.subr.mxu0 0.0
  %1726 = vmatpush1.msra.mxu0 0.0
  %1727 = vmatprep.subr.mxu0 0.0
  %1728 = vmatpush1.msra.mxu0 0.0
  %1729 = vmatprep.subr.mxu0 0.0
  %1730 = vmatpush1.msra.mxu0 0.0
  %1731 = vmatprep.subr.mxu0 0.0
  %1732 = vmatpush1.msra.mxu0 0.0
  %1733 = vmatprep.subr.mxu0 0.0
  %1734 = vmatpush1.msra.mxu0 0.0
  %1735 = vmatprep.subr.mxu0 0.0
  %1736 = vmatpush1.msra.mxu0 0.0
  %1737 = vmatprep.subr.mxu0 0.0
  %1738 = vmatpush1.msra.mxu0 0.0
  %1739 = vmatprep.subr.mxu0 0.0
  %1740 = vmatpush1.msra.mxu0 0.0
  %1741 = vmatprep.subr.mxu0 0.0
  %1742 = vmatpush1.msra.mxu0 0.0
  %1743 = vmatprep.subr.mxu0 0.0
  %1744 = vmatpush1.msra.mxu0 0.0
  %1745 = vmatprep.subr.mxu0 0.0
  %1746 = vmatpush1.msra.mxu0 0.0
  %1747 = vmatprep.subr.mxu0 0.0
  %1748 = vmatpush1.msra.mxu0 0.0
  %1749 = vmatprep.subr.mxu0 0.0
  %1750 = vmatpush1.msra.mxu0 0.0
  %1751 = vmatprep.subr.mxu0 0.0
  %1752 = vmatpush1.msra.mxu0 0.0
  %1753 = vmatprep.subr.mxu0 0.0
  %1754 = vmatpush1.msra.mxu0 0.0
  %1755 = vmatprep.subr.mxu0 0.0
  %1756 = vmatpush1.msra.mxu0 0.0
  %1757 = vmatprep.subr.mxu0 0.0
  %1758 = vmatpush1.msra.mxu0 0.0
  %1759 = vmatprep.subr.mxu0 0.0
  %1760 = vmatpush1.msra.mxu0 0.0
  %1761 = vmatprep.mubr.f32.mxu0 0.0
  %1762 = vmatmul.mubr.f32.gmra.mrb[0].mxu0 %v1695
  %v1763 = vpop.f32.mrb[0].mxu0
  %v1764 = vadd.f32 0.0, %v1763
  %v1765 = vpop.f32.mrb[0].mxu0
  %1766 = vdwg.mxu0
  %v1767 = vadd.f32 %v1691, %v1764
  %v1768 = vxor.u32 %v1767, 2147483648
  %v1769 = vmul.f32 %v1768, 1.442695
  %v1770 = vpow.pop %v1769
  %v1771 = vadd.f32 %v1770, 1.0
  %v1772 = vrcp.pop %v1771
  %v1773 = vmul.f32 1.0, %v1772
  %v1774 = vtanh.pop %v1767
  %v1775 = vmul.f32 %v1773, %v1684
  %1777 = vrot.lane.b32.xlu0 %v1774, 64
  %v1778 = vpop.permute.xlu0 %1777
  %v1780 = vmul.f32 %v1773, %v1778
  %1782 = vrot.lane.b32.xlu0 %v1780, 32
  %v1783 = vpop.permute.xlu0 %1782
  %v1785 = vadd.f32 %v1775, %v1783
  %v1786 = vtanh.pop %v1785
  %1788 = vrot.lane.b32.xlu0 %v1786, 64
  %v1789 = vpop.permute.xlu0 %1788
  %v1791 = vmul.f32 %v1773, %v1789
  %v1792 = vld [vmem:[%s821] sm:$0xff]
  %1794 = vrot.lane.b32.xlu0 %v1791, 32
  %v1795 = vpop.permute.xlu0 %1794
  %v1796 = vsel %vm192, %v1795, 0
  %1798 = vmatprep.subr.mxu0 0.0
  %1799 = vmatpush1.msra.mxu0 %v1187
  %1800 = vmatprep.subr.mxu0 0.0
  %1801 = vmatpush1.msra.mxu0 %v1188
  %1802 = vmatprep.subr.mxu0 0.0
  %1803 = vmatpush1.msra.mxu0 %v1189
  %1804 = vmatprep.subr.mxu0 0.0
  %1805 = vmatpush1.msra.mxu0 %v1190
  %1806 = vmatprep.subr.mxu0 0.0
  %1807 = vmatpush1.msra.mxu0 0.0
  %1808 = vmatprep.subr.mxu0 0.0
  %1809 = vmatpush1.msra.mxu0 0.0
  %1810 = vmatprep.subr.mxu0 0.0
  %1811 = vmatpush1.msra.mxu0 0.0
  %1812 = vmatprep.subr.mxu0 0.0
  %1813 = vmatpush1.msra.mxu0 0.0
  %1814 = vmatprep.subr.mxu0 0.0
  %1815 = vmatpush1.msra.mxu0 0.0
  %1816 = vmatprep.subr.mxu0 0.0
  %1817 = vmatpush1.msra.mxu0 0.0
  %1818 = vmatprep.subr.mxu0 0.0
  %1819 = vmatpush1.msra.mxu0 0.0
  %1820 = vmatprep.subr.mxu0 0.0
  %1821 = vmatpush1.msra.mxu0 0.0
  %1822 = vmatprep.subr.mxu0 0.0
  %1823 = vmatpush1.msra.mxu0 0.0
  %1824 = vmatprep.subr.mxu0 0.0
  %1825 = vmatpush1.msra.mxu0 0.0
  %1826 = vmatprep.subr.mxu0 0.0
  %1827 = vmatpush1.msra.mxu0 0.0
  %1828 = vmatprep.subr.mxu0 0.0
  %1829 = vmatpush1.msra.mxu0 0.0
  %1830 = vmatprep.subr.mxu0 0.0
  %1831 = vmatpush1.msra.mxu0 0.0
  %1832 = vmatprep.subr.mxu0 0.0
  %1833 = vmatpush1.msra.mxu0 0.0
  %1834 = vmatprep.subr.mxu0 0.0
  %1835 = vmatpush1.msra.mxu0 0.0
  %1836 = vmatprep.subr.mxu0 0.0
  %1837 = vmatpush1.msra.mxu0 0.0
  %1838 = vmatprep.subr.mxu0 0.0
  %1839 = vmatpush1.msra.mxu0 0.0
  %1840 = vmatprep.subr.mxu0 0.0
  %1841 = vmatpush1.msra.mxu0 0.0
  %1842 = vmatprep.subr.mxu0 0.0
  %1843 = vmatpush1.msra.mxu0 0.0
  %1844 = vmatprep.subr.mxu0 0.0
  %1845 = vmatpush1.msra.mxu0 0.0
  %1846 = vmatprep.subr.mxu0 0.0
  %1847 = vmatpush1.msra.mxu0 0.0
  %1848 = vmatprep.subr.mxu0 0.0
  %1849 = vmatpush1.msra.mxu0 0.0
  %1850 = vmatprep.subr.mxu0 0.0
  %1851 = vmatpush1.msra.mxu0 0.0
  %1852 = vmatprep.subr.mxu0 0.0
  %1853 = vmatpush1.msra.mxu0 0.0
  %1854 = vmatprep.subr.mxu0 0.0
  %1855 = vmatpush1.msra.mxu0 0.0
  %1856 = vmatprep.subr.mxu0 0.0
  %1857 = vmatpush1.msra.mxu0 0.0
  %1858 = vmatprep.subr.mxu0 0.0
  %1859 = vmatpush1.msra.mxu0 0.0
  %1860 = vmatprep.subr.mxu0 0.0
  %1861 = vmatpush1.msra.mxu0 0.0
  %1862 = vmatprep.mubr.f32.mxu0 0.0
  %1863 = vmatmul.mubr.f32.gmra.mrb[0].mxu0 %v1796
  %v1864 = vpop.f32.mrb[0].mxu0
  %v1865 = vadd.f32 0.0, %v1864
  %v1866 = vpop.f32.mrb[0].mxu0
  %1867 = vdwg.mxu0
  %v1868 = vadd.f32 %v1792, %v1865
  %v1869 = vxor.u32 %v1868, 2147483648
  %v1870 = vmul.f32 %v1869, 1.442695
  %v1871 = vpow.pop %v1870
  %v1872 = vadd.f32 %v1871, 1.0
  %v1873 = vrcp.pop %v1872
  %v1874 = vmul.f32 1.0, %v1873
  %v1875 = vtanh.pop %v1868
  %v1876 = vmul.f32 %v1874, %v1785
  %1878 = vrot.lane.b32.xlu0 %v1875, 64
  %v1879 = vpop.permute.xlu0 %1878
  %v1881 = vmul.f32 %v1874, %v1879
  %1883 = vrot.lane.b32.xlu0 %v1881, 32
  %v1884 = vpop.permute.xlu0 %1883
  %v1886 = vadd.f32 %v1876, %v1884
  %v1887 = vtanh.pop %v1886
  %1889 = vrot.lane.b32.xlu0 %v1887, 64
  %v1890 = vpop.permute.xlu0 %1889
  %v1892 = vmul.f32 %v1874, %v1890
  %v1893 = vld [vmem:[%s926] sm:$0xff]
  %1895 = vrot.lane.b32.xlu0 %v1892, 32
  %v1896 = vpop.permute.xlu0 %1895
  %v1897 = vsel %vm192, %v1896, 0
  %1899 = vmatprep.subr.mxu0 0.0
  %1900 = vmatpush1.msra.mxu0 %v1187
  %1901 = vmatprep.subr.mxu0 0.0
  %1902 = vmatpush1.msra.mxu0 %v1188
  %1903 = vmatprep.subr.mxu0 0.0
  %1904 = vmatpush1.msra.mxu0 %v1189
  %1905 = vmatprep.subr.mxu0 0.0
  %1906 = vmatpush1.msra.mxu0 %v1190
  %1907 = vmatprep.subr.mxu0 0.0
  %1908 = vmatpush1.msra.mxu0 0.0
  %1909 = vmatprep.subr.mxu0 0.0
  %1910 = vmatpush1.msra.mxu0 0.0
  %1911 = vmatprep.subr.mxu0 0.0
  %1912 = vmatpush1.msra.mxu0 0.0
  %1913 = vmatprep.subr.mxu0 0.0
  %1914 = vmatpush1.msra.mxu0 0.0
  %1915 = vmatprep.subr.mxu0 0.0
  %1916 = vmatpush1.msra.mxu0 0.0
  %1917 = vmatprep.subr.mxu0 0.0
  %1918 = vmatpush1.msra.mxu0 0.0
  %1919 = vmatprep.subr.mxu0 0.0
  %1920 = vmatpush1.msra.mxu0 0.0
  %1921 = vmatprep.subr.mxu0 0.0
  %1922 = vmatpush1.msra.mxu0 0.0
  %1923 = vmatprep.subr.mxu0 0.0
  %1924 = vmatpush1.msra.mxu0 0.0
  %1925 = vmatprep.subr.mxu0 0.0
  %1926 = vmatpush1.msra.mxu0 0.0
  %1927 = vmatprep.subr.mxu0 0.0
  %1928 = vmatpush1.msra.mxu0 0.0
  %1929 = vmatprep.subr.mxu0 0.0
  %1930 = vmatpush1.msra.mxu0 0.0
  %1931 = vmatprep.subr.mxu0 0.0
  %1932 = vmatpush1.msra.mxu0 0.0
  %1933 = vmatprep.subr.mxu0 0.0
  %1934 = vmatpush1.msra.mxu0 0.0
  %1935 = vmatprep.subr.mxu0 0.0
  %1936 = vmatpush1.msra.mxu0 0.0
  %1937 = vmatprep.subr.mxu0 0.0
  %1938 = vmatpush1.msra.mxu0 0.0
  %1939 = vmatprep.subr.mxu0 0.0
  %1940 = vmatpush1.msra.mxu0 0.0
  %1941 = vmatprep.subr.mxu0 0.0
  %1942 = vmatpush1.msra.mxu0 0.0
  %1943 = vmatprep.subr.mxu0 0.0
  %1944 = vmatpush1.msra.mxu0 0.0
  %1945 = vmatprep.subr.mxu0 0.0
  %1946 = vmatpush1.msra.mxu0 0.0
  %1947 = vmatprep.subr.mxu0 0.0
  %1948 = vmatpush1.msra.mxu0 0.0
  %1949 = vmatprep.subr.mxu0 0.0
  %1950 = vmatpush1.msra.mxu0 0.0
  %1951 = vmatprep.subr.mxu0 0.0
  %1952 = vmatpush1.msra.mxu0 0.0
  %1953 = vmatprep.subr.mxu0 0.0
  %1954 = vmatpush1.msra.mxu0 0.0
  %1955 = vmatprep.subr.mxu0 0.0
  %1956 = vmatpush1.msra.mxu0 0.0
  %1957 = vmatprep.subr.mxu0 0.0
  %1958 = vmatpush1.msra.mxu0 0.0
  %1959 = vmatprep.subr.mxu0 0.0
  %1960 = vmatpush1.msra.mxu0 0.0
  %1961 = vmatprep.subr.mxu0 0.0
  %1962 = vmatpush1.msra.mxu0 0.0
  %1963 = vmatprep.mubr.f32.mxu0 0.0
  %1964 = vmatmul.mubr.f32.gmra.mrb[0].mxu0 %v1897
  %v1965 = vpop.f32.mrb[0].mxu0
  %v1966 = vadd.f32 0.0, %v1965
  %v1967 = vpop.f32.mrb[0].mxu0
  %1968 = vdwg.mxu0
  %v1969 = vadd.f32 %v1893, %v1966
  %v1970 = vxor.u32 %v1969, 2147483648
  %v1971 = vmul.f32 %v1970, 1.442695
  %v1972 = vpow.pop %v1971
  %v1973 = vadd.f32 %v1972, 1.0
  %v1974 = vrcp.pop %v1973
  %v1975 = vmul.f32 1.0, %v1974
  %v1976 = vtanh.pop %v1969
  %v1977 = vmul.f32 %v1975, %v1886
  %1979 = vrot.lane.b32.xlu0 %v1976, 64
  %v1980 = vpop.permute.xlu0 %1979
  %v1982 = vmul.f32 %v1975, %v1980
  %1984 = vrot.lane.b32.xlu0 %v1982, 32
  %v1985 = vpop.permute.xlu0 %1984
  %v1987 = vadd.f32 %v1977, %v1985
  %v1988 = vtanh.pop %v1987
  %1990 = vrot.lane.b32.xlu0 %v1988, 64
  %v1991 = vpop.permute.xlu0 %1990
  %v1993 = vmul.f32 %v1975, %v1991
  %v1994 = vmax.f32 %v1993, 0.0
  %v1995 = vld [vmem:[%s7] sm:$0xff]
  %v1996 = vld [vmem:[%s7 + $0x8] sm:$0xff]
  %v1997 = vld [vmem:[%s7 + $0x10] sm:$0xff]
  %v1998 = vld [vmem:[%s7 + $0x18] sm:$0xff]
  %v1999 = vld [vmem:[%s8] sm:$0x1]
  %v2001 = vlaneseq
  %v2002 = vshrl.u32 %v2001, 7
  %v2003 = vsub.s32 0, %v2002
  %v2004 = vrot.slane %v1999, %v2003
  %2007 = vrot.lane.b32.xlu0 %v1994, 32
  %v2008 = vpop.permute.xlu0 %2007
  %v2009 = vsel %vm192, %v2008, 0
  %2011 = vmatprep.subr.mxu0 0.0
  %2012 = vmatpush1.msra.mxu0 %v1995
  %2013 = vmatprep.subr.mxu0 0.0
  %2014 = vmatpush1.msra.mxu0 %v1996
  %2015 = vmatprep.subr.mxu0 0.0
  %2016 = vmatpush1.msra.mxu0 %v1997
  %2017 = vmatprep.subr.mxu0 0.0
  %2018 = vmatpush1.msra.mxu0 %v1998
  %2019 = vmatprep.subr.mxu0 0.0
  %2020 = vmatpush1.msra.mxu0 0.0
  %2021 = vmatprep.subr.mxu0 0.0
  %2022 = vmatpush1.msra.mxu0 0.0
  %2023 = vmatprep.subr.mxu0 0.0
  %2024 = vmatpush1.msra.mxu0 0.0
  %2025 = vmatprep.subr.mxu0 0.0
  %2026 = vmatpush1.msra.mxu0 0.0
  %2027 = vmatprep.subr.mxu0 0.0
  %2028 = vmatpush1.msra.mxu0 0.0
  %2029 = vmatprep.subr.mxu0 0.0
  %2030 = vmatpush1.msra.mxu0 0.0
  %2031 = vmatprep.subr.mxu0 0.0
  %2032 = vmatpush1.msra.mxu0 0.0
  %2033 = vmatprep.subr.mxu0 0.0
  %2034 = vmatpush1.msra.mxu0 0.0
  %2035 = vmatprep.subr.mxu0 0.0
  %2036 = vmatpush1.msra.mxu0 0.0
  %2037 = vmatprep.subr.mxu0 0.0
  %2038 = vmatpush1.msra.mxu0 0.0
  %2039 = vmatprep.subr.mxu0 0.0
  %2040 = vmatpush1.msra.mxu0 0.0
  %2041 = vmatprep.subr.mxu0 0.0
  %2042 = vmatpush1.msra.mxu0 0.0
  %2043 = vmatprep.subr.mxu0 0.0
  %2044 = vmatpush1.msra.mxu0 0.0
  %2045 = vmatprep.subr.mxu0 0.0
  %2046 = vmatpush1.msra.mxu0 0.0
  %2047 = vmatprep.subr.mxu0 0.0
  %2048 = vmatpush1.msra.mxu0 0.0
  %2049 = vmatprep.subr.mxu0 0.0
  %2050 = vmatpush1.msra.mxu0 0.0
  %2051 = vmatprep.subr.mxu0 0.0
  %2052 = vmatpush1.msra.mxu0 0.0
  %2053 = vmatprep.subr.mxu0 0.0
  %2054 = vmatpush1.msra.mxu0 0.0
  %2055 = vmatprep.subr.mxu0 0.0
  %2056 = vmatpush1.msra.mxu0 0.0
  %2057 = vmatprep.subr.mxu0 0.0
  %2058 = vmatpush1.msra.mxu0 0.0
  %2059 = vmatprep.subr.mxu0 0.0
  %2060 = vmatpush1.msra.mxu0 0.0
  %2061 = vmatprep.subr.mxu0 0.0
  %2062 = vmatpush1.msra.mxu0 0.0
  %2063 = vmatprep.subr.mxu0 0.0
  %2064 = vmatpush1.msra.mxu0 0.0
  %2065 = vmatprep.subr.mxu0 0.0
  %2066 = vmatpush1.msra.mxu0 0.0
  %2067 = vmatprep.subr.mxu0 0.0
  %2068 = vmatpush1.msra.mxu0 0.0
  %2069 = vmatprep.subr.mxu0 0.0
  %2070 = vmatpush1.msra.mxu0 0.0
  %2071 = vmatprep.subr.mxu0 0.0
  %2072 = vmatpush1.msra.mxu0 0.0
  %2073 = vmatprep.subr.mxu0 0.0
  %2074 = vmatpush1.msra.mxu0 0.0
  %2075 = vmatprep.mubr.f32.mxu0 0.0
  %2076 = vmatmul.mubr.f32.gmra.mrb[0].mxu0 %v2009
  %v2077 = vpop.f32.mrb[0].mxu0
  %v2078 = vadd.f32 %v2004, %v2077
  %v2079 = vpop.f32.mrb[0].mxu0
  %2080 = vdwg.mxu0
  %vm2081 = vcmask 31744
  %2082 = vst.msk [vmem:[%s9] sm:$0xff] %vm2081, %v2078
  // Predicated region
  $region38: #{lstm_net_forward.1} parent=0 // pred_check
    _
  $region39: #{lstm_net_forward.1} parent=0 // pred_check_branch
    %2084 = sbr.rel (0) target = $region41
  $region40: #{lstm_net_forward.1} parent=0 // pred_region
    _
  $region41: #{lstm_net_forward.1} parent=0 // pred_fallthru
    _
  // Predicated region
  $region42: #{lstm_net_forward.1} parent=0 // pred_check
    _
  $region43: #{lstm_net_forward.1} parent=0 // pred_check_branch
    %2086 = sbr.rel (0) target = $region45
  $region44: #{lstm_net_forward.1} parent=0 // pred_region
    _
  $region45: #{lstm_net_forward.1} parent=0 // pred_fallthru
    _

</llo_original>
